<compile_context>
chip_gen: v7x
topology: tpu7x:2x2x1
jax: 0.10.0
libtpu: 0.0.40
codegen_flags: <defaults>
</compile_context>

<pallas_src>
import math
import functools
import jax
import jax.numpy as jnp
from jax.experimental import pallas as pl
from jax.experimental.pallas import tpu as pltpu


# ----------------------------------------------------------------------------
# Glue: farthest point sampling + kNN grouping (gather/topk -> plain JAX)
# TODO(synk): FPS/kNN grouping are data-dependent gathers; kept in JAX, not Pallas.
# ----------------------------------------------------------------------------
def farthest_point_sampling_jax(points, n_samples):
    """points: (B, N, D) -> indices (B, n_samples) int32."""
    B, N, D = points.shape
    n_samples = min(n_samples, N)

    def body(i, state):
        centroids, distance, farthest = state
        centroids = centroids.at[:, i].set(farthest)
        centroid_pts = jnp.take_along_axis(points, farthest[:, None, None], axis=1)
        dist = jnp.sum((points - centroid_pts) ** 2, axis=2)
        distance = jnp.minimum(distance, dist)
        farthest = jnp.argmax(distance, axis=1).astype(jnp.int32)
        return centroids, distance, farthest

    centroids = jnp.zeros((B, n_samples), dtype=jnp.int32)
    distance = jnp.full((B, N), 1e10, dtype=jnp.float32)
    # TODO(synk): reference seeds the first centroid with torch.randint; we use index 0.
    farthest = jnp.zeros((B,), dtype=jnp.int32)
    centroids, _, _ = jax.lax.fori_loop(0, n_samples, body, (centroids, distance, farthest))
    return centroids


def group_knn_jax(pnts, cntrds, feats, k):
    """pnts (B,N,3), cntrds (B,n,3), feats (B,N,C) -> (B,n,k,3), (B,n,k,C)."""
    d2 = jnp.sum((cntrds[:, :, None, :] - pnts[:, None, :, :]) ** 2, axis=-1)  # (B,n,N)
    _, idx = jax.lax.top_k(-d2, k)                                             # nearest-first
    gather = jax.vmap(lambda arr, ix: arr[ix])
    return gather(pnts, idx), gather(feats, idx)


# ----------------------------------------------------------------------------
# Pallas kernel: one embedding stage, all convs/BN/ReLU/pools fused
# ----------------------------------------------------------------------------
def _stage_front(x_ref, w1_ref, b1_ref, w2p_ref, w2l_ref, b2a_ref):
    """Fused conv1 (+bias+BN+ReLU), k-max-pool, concat-as-split-matmul, BN+ReLU."""
    x = x_ref[...]                                   # (tm, k, cin) channels-last
    tm, kk, cin = x.shape
    xf = x.reshape(tm * kk, cin)
    # conv1 fully fused: single matmul + bias + ReLU
    h = jnp.maximum(
        jnp.dot(xf, w1_ref[...], preferred_element_type=jnp.float32) + b1_ref[...], 0.0)
    E = h.shape[-1]
    pooled = jnp.max(h.reshape(tm, kk, E), axis=1)   # k-pool over sublanes, E stays in lanes
    # cat([pooled, local]) @ W2a  ==  local @ W2a[E:] + pooled @ W2a[:E]   (BN folded in)
    g = jnp.dot(h, w2l_ref[...], preferred_element_type=jnp.float32).reshape(tm, kk, -1)
    g = g + jnp.dot(pooled, w2p_ref[...], preferred_element_type=jnp.float32)[:, None, :]
    return jnp.maximum(g + b2a_ref[...], 0.0)        # (tm, k, 2E)


def _make_stage_kernel(pack2):
    if pack2:
        # Lane-dense output: the final weight is widened [W|0] / [0|W]; the low half
        # of the centroids writes lanes [0:E), the high half writes lanes [E:2E) of
        # the same (tm//2, 2E) block -> a single unmasked full-width store.
        def kernel(x_ref, w1_ref, b1_ref, w2p_ref, w2l_ref, b2a_ref,
                   wlo_ref, blo_ref, whi_ref, bhi_ref, o_ref):
            g = _stage_front(x_ref, w1_ref, b1_ref, w2p_ref, w2l_ref, b2a_ref)
            tm, kk, two_e = g.shape
            half = tm // 2
            gf = g.reshape(tm * kk, two_e)
            lo = jnp.maximum(
                jnp.dot(gf[:half * kk], wlo_ref[...],
                        preferred_element_type=jnp.float32) + blo_ref[...], 0.0)
            hi = jnp.maximum(
                jnp.dot(gf[half * kk:], whi_ref[...],
                        preferred_element_type=jnp.float32) + bhi_ref[...], 0.0)
            w_out = lo.shape[-1]
            o_ref[...] = (jnp.max(lo.reshape(half, kk, w_out), axis=1)
                          + jnp.max(hi.reshape(half, kk, w_out), axis=1))
    else:
        def kernel(x_ref, w1_ref, b1_ref, w2p_ref, w2l_ref, b2a_ref,
                   w2b_ref, b2b_ref, o_ref):
            g = _stage_front(x_ref, w1_ref, b1_ref, w2p_ref, w2l_ref, b2a_ref)
            tm, kk, two_e = g.shape
            o = jnp.maximum(
                jnp.dot(g.reshape(tm * kk, two_e), w2b_ref[...],
                        preferred_element_type=jnp.float32) + b2b_ref[...], 0.0)
            o_ref[...] = jnp.max(o.reshape(tm, kk, -1), axis=1)
    return kernel


def _choose_tile_m(M, kk):
    """Centroids per grid step: >=256 rows per matmul (fills v6e/v7x 256-wide MXU),
    keep >=2 'parallel' steps for dual-TC v7x when there is enough work, otherwise
    a single fat step (grid is a serial loop on 1-TC v5e/v6e)."""
    target = max(2, (256 + kk - 1) // kk)
    for t in range(target, M // 2 + 1):
        if M % t == 0:
            return t                    # >= 2 steps, each with >= target centroids
    return M                            # small problem: one fat step


def run_stage(x, sp):
    """x: (B, n, k, Cin) channels-last grouped features -> (B, n, E)."""
    B, n, kk, cin = x.shape
    M = B * n
    E = sp["w2b"].shape[1]
    xf = x.reshape(M, kk, cin)          # flatten (B, n): fewer, fatter grid steps

    tile_m = _choose_tile_m(M, kk)
    n_steps = M // tile_m
    half = tile_m // 2
    # Lane-dense packed output only when the packed row is a multiple of 128 lanes
    # and the per-step block satisfies the (8,128) sublane rule.
    pack2 = (tile_m % 2 == 0) and ((2 * E) % 128 == 0) and (half % 8 == 0 or n_steps == 1)

    weight_args = [sp["w1"], sp["b1"][None, :], sp["w2p"], sp["w2l"], sp["b2a"][None, :]]
    if pack2:
        zw = jnp.zeros_like(sp["w2b"])
        zb = jnp.zeros_like(sp["b2b"])
        w_lo = jnp.concatenate([sp["w2b"], zw], axis=1)          # (2E, 2E)
        w_hi = jnp.concatenate([zw, sp["w2b"]], axis=1)          # (2E, 2E)
        b_lo = jnp.concatenate([sp["b2b"], zb])[None, :]
        b_hi = jnp.concatenate([zb, sp["b2b"]])[None, :]
        weight_args += [w_lo, b_lo, w_hi, b_hi]
        out_shape = jax.ShapeDtypeStruct((n_steps * half, 2 * E), jnp.float32)
        out_spec = pl.BlockSpec((half, 2 * E), lambda i: (i, 0))
    else:
        weight_args += [sp["w2b"], sp["b2b"][None, :]]
        out_shape = jax.ShapeDtypeStruct((M, E), jnp.float32)
        out_spec = pl.BlockSpec((tile_m, E), lambda i: (i, 0))

    in_specs = [pl.BlockSpec((tile_m, kk, cin), lambda i: (i, 0, 0))]
    in_specs += [pl.BlockSpec(w.shape, lambda i: (0, 0)) for w in weight_args]  # all 2-D

    # TODO(synk): for scaled-up configs, cast x / fused weights to bf16 for the MXU
    # (keep f32 accumulation) and re-budget VMEM for v7x's 64 MiB.
    out = pl.pallas_call(
        _make_stage_kernel(pack2),
        out_shape=out_shape,
        grid=(n_steps,),
        in_specs=in_specs,
        out_specs=out_spec,
        compiler_params=pltpu.CompilerParams(dimension_semantics=("parallel",)),
    )(xf, *weight_args)

    if pack2:
        # un-pack: row r of step i = [centroid i*tile_m + r | centroid i*tile_m + half + r]
        out = out.reshape(n_steps, half, 2, E).transpose(0, 2, 1, 3).reshape(M, E)
    return out.reshape(B, n, E)


# ----------------------------------------------------------------------------
# Parameter construction (deterministic, mirrors P3Embed.__init__ shapes)
# ----------------------------------------------------------------------------
def init_params(key, in_channels=3, sample_ratio=0.25, scale=4, layers=4, embed_dim=64):
    assert layers == 4, "this synthetic build mirrors the default layers=4 structure"
    stages = int(math.log(1 / sample_ratio, scale))
    embed_dim = int(embed_dim // 2 ** (stages - 1))
    eps = 1e-5
    params = []
    ic, ed = in_channels, embed_dim

    def nrm(k_, shp, s=0.1):
        return (jax.random.normal(k_, shp) * s).astype(jnp.float32)

    for _ in range(stages):
        E = ed
        cin = ic + 3
        key, *ks = jax.random.split(key, 20)
        w1a = nrm(ks[0], (cin, E))                         # Conv2d(cin,E,1,bias=False)
        w1b = nrm(ks[1], (E, E)); b1b = nrm(ks[2], (E,))   # Conv2d(E,E,1,bias=True)
        # TODO(synk): BatchNorm in eval mode (running stats folded to affine);
        #             PyTorch default train mode would use batch statistics.
        g1 = 1.0 + nrm(ks[3], (E,)); bt1 = nrm(ks[4], (E,))
        mu1 = nrm(ks[5], (E,)); v1 = 1.0 + jnp.abs(nrm(ks[6], (E,)))
        s1 = g1 / jnp.sqrt(v1 + eps); t1 = bt1 - mu1 * s1

        w2a = nrm(ks[7], (2 * E, 2 * E))                   # Conv2d(2E,2E,1,bias=False)
        g2a = 1.0 + nrm(ks[8], (2 * E,)); bt2a = nrm(ks[9], (2 * E,))
        mu2a = nrm(ks[10], (2 * E,)); v2a = 1.0 + jnp.abs(nrm(ks[11], (2 * E,)))
        s2a = g2a / jnp.sqrt(v2a + eps); t2a = bt2a - mu2a * s2a

        w2b = nrm(ks[12], (2 * E, E))                      # Conv2d(2E,E,1,bias=False)
        g2b = 1.0 + nrm(ks[13], (E,)); bt2b = nrm(ks[14], (E,))
        mu2b = nrm(ks[15], (E,)); v2b = 1.0 + jnp.abs(nrm(ks[16], (E,)))
        s2b = g2b / jnp.sqrt(v2b + eps); t2b = bt2b - mu2b * s2b

        params.append(dict(w1a=w1a, w1b=w1b, b1b=b1b, s1=s1, t1=t1,
                           w2a=w2a, s2a=s2a, t2a=t2a,
                           w2b=w2b, s2b=s2b, t2b=t2b))
        ic, ed = E, E * 2
    return params


def fold_stage_params(raw):
    """One-time host-side algebraic fusion (exact; no nonlinearity crossed)."""
    E = raw["w2b"].shape[1]
    w1 = (raw["w1a"] @ raw["w1b"]) * raw["s1"][None, :]    # conv1a . conv1b . BN-scale
    b1 = raw["b1b"] * raw["s1"] + raw["t1"]
    # concat order in the reference is [pooled, local] along channels:
    w2p = raw["w2a"][:E] * raw["s2a"][None, :]             # input chans 0..E-1  -> pooled
    w2l = raw["w2a"][E:] * raw["s2a"][None, :]             # input chans E..2E-1 -> local
    b2a = raw["t2a"]
    w2b = raw["w2b"] * raw["s2b"][None, :]
    b2b = raw["t2b"]
    return dict(w1=w1, b1=b1, w2p=w2p, w2l=w2l, b2a=b2a, w2b=w2b, b2b=b2b)


# ----------------------------------------------------------------------------
# Full forward (matches P3Embed.forward)
# ----------------------------------------------------------------------------
@functools.partial(jax.jit, static_argnums=(3,))
def p3embed_forward(p, f, stage_params, k):
    """p: (B, N, 3) points, f: (B, C, N) features -> ([points...], [features...])."""
    out_p, out_f = [p], [f]
    N = p.shape[1]
    for sp in stage_params:
        cur_pnt = out_p[-1]                               # (B, N, 3)
        cur_feat = jnp.transpose(out_f[-1], (0, 2, 1))    # (B, N, C)
        N = N // 4
        idx = farthest_point_sampling_jax(cur_pnt, N)     # (B, N')
        cntrd = jnp.take_along_axis(cur_pnt, idx[:, :, None], axis=1)   # (B, N', 3)
        dp, fj = group_knn_jax(cur_pnt, cntrd, cur_feat, k)             # (B,N',k,3),(B,N',k,C)
        x = jnp.concatenate([dp, fj], axis=-1)            # channels-last cat == NCHW cat dim=1
        new_f = run_stage(x, sp)                          # (B, N', E)
        out_p.append(cntrd)
        out_f.append(jnp.transpose(new_f, (0, 2, 1)))     # (B, E, N') PyTorch convention
    return out_p, out_f


if __name__ == "__main__":
    # Small config: in_channels=3, sample_ratio=0.25, scale=4 -> 1 stage,
    # k=8 neighbours, layers=4, embed_dim=64.
    B, N, K_NEIGH = 2, 64, 8
    key = jax.random.PRNGKey(0)
    kp, kf, kw = jax.random.split(key, 3)
    p = jax.random.normal(kp, (B, N, 3), dtype=jnp.float32)   # (B, N, 3) points
    f = jax.random.normal(kf, (B, 3, N), dtype=jnp.float32)   # (B, C, N) features

    raw_params = init_params(kw, in_channels=3, sample_ratio=0.25, scale=4,
                             layers=4, embed_dim=64)
    folded_params = [fold_stage_params(sp) for sp in raw_params]   # host-side, once

    out_p, out_f = p3embed_forward(p, f, folded_params, K_NEIGH)
    jax.block_until_ready(out_p[-1])   # (B, 16, 3)
    jax.block_until_ready(out_f[-1])   # (B, 64, 16)
    assert out_p[-1].shape == (B, N // 4, 3)
    assert out_f[-1].shape == (B, 64, N // 4)
    print("KERNEL_OK")
</pallas_src>

<mosaic_0001>
module attributes {stable_mosaic.version = 11 : i64} {
  func.func @kernel(%arg0: i32, %arg1: memref<32x8x6xf32, #tpu.memory_space<vmem>>, %arg2: memref<6x64xf32, #tpu.memory_space<vmem>>, %arg3: memref<1x64xf32, #tpu.memory_space<vmem>>, %arg4: memref<64x128xf32, #tpu.memory_space<vmem>>, %arg5: memref<64x128xf32, #tpu.memory_space<vmem>>, %arg6: memref<1x128xf32, #tpu.memory_space<vmem>>, %arg7: memref<128x128xf32, #tpu.memory_space<vmem>>, %arg8: memref<1x128xf32, #tpu.memory_space<vmem>>, %arg9: memref<128x128xf32, #tpu.memory_space<vmem>>, %arg10: memref<1x128xf32, #tpu.memory_space<vmem>>, %arg11: memref<16x128xf32, #tpu.memory_space<vmem>>) attributes {dimension_semantics = [#tpu.dimension_semantics<parallel>], iteration_bounds = array<i64: 1>, scalar_prefetch = 0 : i64, scratch_operands = 0 : i64, tpu.core_type = #tpu.core_type<tc>, window_params = [{transform_indices = @transform_0, window_bounds = array<i64: 32, 8, 6>}, {pipeline_mode = #tpu.pipeline_mode<synchronous>, transform_indices = @transform_1, window_bounds = array<i64: 6, 64>}, {pipeline_mode = #tpu.pipeline_mode<synchronous>, transform_indices = @transform_2, window_bounds = array<i64: 1, 64>}, {pipeline_mode = #tpu.pipeline_mode<synchronous>, transform_indices = @transform_3, window_bounds = array<i64: 64, 128>}, {pipeline_mode = #tpu.pipeline_mode<synchronous>, transform_indices = @transform_4, window_bounds = array<i64: 64, 128>}, {pipeline_mode = #tpu.pipeline_mode<synchronous>, transform_indices = @transform_5, window_bounds = array<i64: 1, 128>}, {pipeline_mode = #tpu.pipeline_mode<synchronous>, transform_indices = @transform_6, window_bounds = array<i64: 128, 128>}, {pipeline_mode = #tpu.pipeline_mode<synchronous>, transform_indices = @transform_7, window_bounds = array<i64: 1, 128>}, {pipeline_mode = #tpu.pipeline_mode<synchronous>, transform_indices = @transform_8, window_bounds = array<i64: 128, 128>}, {pipeline_mode = #tpu.pipeline_mode<synchronous>, transform_indices = @transform_9, window_bounds = array<i64: 1, 128>}, {transform_indices = @transform_10, window_bounds = array<i64: 16, 128>}]} {
    %c0 = arith.constant 0 : index
    %c0_0 = arith.constant 0 : index
    %c0_1 = arith.constant 0 : index
    %0 = vector.load %arg1[%c0, %c0_0, %c0_1] : memref<32x8x6xf32, #tpu.memory_space<vmem>>, vector<32x8x6xf32>
    %1 = vector.shape_cast %0 : vector<32x8x6xf32> to vector<256x6xf32>
    %c0_2 = arith.constant 0 : index
    %c0_3 = arith.constant 0 : index
    %2 = vector.load %arg2[%c0_2, %c0_3] : memref<6x64xf32, #tpu.memory_space<vmem>>, vector<6x64xf32>
    %cst = arith.constant dense<0.000000e+00> : vector<256x64xf32>
    %3 = tpu.matmul %1, %2, %cst {dimension_numbers = #tpu.dot_dimension_numbers<[1], [0], [0], [1], [0, 0, 1, 1], [], []>} : vector<256x6xf32>, vector<6x64xf32>, vector<256x64xf32> -> vector<256x64xf32>
    %c0_4 = arith.constant 0 : index
    %c0_5 = arith.constant 0 : index
    %4 = vector.load %arg3[%c0_4, %c0_5] : memref<1x64xf32, #tpu.memory_space<vmem>>, vector<1x64xf32>
    %5 = vector.broadcast %4 : vector<1x64xf32> to vector<256x64xf32>
    %6 = arith.addf %3, %5 : vector<256x64xf32>
    %cst_6 = arith.constant 0.000000e+00 : f32
    %7 = vector.broadcast %cst_6 : f32 to vector<256x64xf32>
    %8 = arith.maximumf %6, %7 : vector<256x64xf32>
    %9 = vector.shape_cast %8 : vector<256x64xf32> to vector<32x8x64xf32>
    %cst_7 = arith.constant dense<0xFF800000> : vector<32x64xf32>
    %10 = vector.multi_reduction <maximumf>, %9, %cst_7 [1] : vector<32x8x64xf32> to vector<32x64xf32>
    %c0_8 = arith.constant 0 : index
    %c0_9 = arith.constant 0 : index
    %11 = vector.load %arg5[%c0_8, %c0_9] : memref<64x128xf32, #tpu.memory_space<vmem>>, vector<64x128xf32>
    %cst_10 = arith.constant dense<0.000000e+00> : vector<256x128xf32>
    %12 = tpu.matmul %8, %11, %cst_10 {dimension_numbers = #tpu.dot_dimension_numbers<[1], [0], [0], [1], [0, 0, 1, 1], [], []>} : vector<256x64xf32>, vector<64x128xf32>, vector<256x128xf32> -> vector<256x128xf32>
    %13 = vector.shape_cast %12 : vector<256x128xf32> to vector<32x8x128xf32>
    %c0_11 = arith.constant 0 : index
    %c0_12 = arith.constant 0 : index
    %14 = vector.load %arg4[%c0_11, %c0_12] : memref<64x128xf32, #tpu.memory_space<vmem>>, vector<64x128xf32>
    %cst_13 = arith.constant dense<0.000000e+00> : vector<32x128xf32>
    %15 = tpu.matmul %10, %14, %cst_13 {dimension_numbers = #tpu.dot_dimension_numbers<[1], [0], [0], [1], [0, 0, 1, 1], [], []>} : vector<32x64xf32>, vector<64x128xf32>, vector<32x128xf32> -> vector<32x128xf32>
    %16 = vector.shape_cast %15 : vector<32x128xf32> to vector<32x1x128xf32>
    %17 = vector.broadcast %16 : vector<32x1x128xf32> to vector<32x8x128xf32>
    %18 = arith.addf %13, %17 : vector<32x8x128xf32>
    %c0_14 = arith.constant 0 : index
    %c0_15 = arith.constant 0 : index
    %19 = vector.load %arg6[%c0_14, %c0_15] : memref<1x128xf32, #tpu.memory_space<vmem>>, vector<1x128xf32>
    %20 = vector.shape_cast %19 : vector<1x128xf32> to vector<1x1x128xf32>
    %21 = vector.broadcast %20 : vector<1x1x128xf32> to vector<32x8x128xf32>
    %22 = arith.addf %18, %21 : vector<32x8x128xf32>
    %cst_16 = arith.constant 0.000000e+00 : f32
    %23 = vector.broadcast %cst_16 : f32 to vector<32x8x128xf32>
    %24 = arith.maximumf %22, %23 : vector<32x8x128xf32>
    %25 = vector.shape_cast %24 : vector<32x8x128xf32> to vector<256x128xf32>
    %26 = vector.extract_strided_slice %25 {offsets = [0, 0], sizes = [128, 128], strides = [1, 1]} : vector<256x128xf32> to vector<128x128xf32>
    %c0_17 = arith.constant 0 : index
    %c0_18 = arith.constant 0 : index
    %27 = vector.load %arg7[%c0_17, %c0_18] : memref<128x128xf32, #tpu.memory_space<vmem>>, vector<128x128xf32>
    %cst_19 = arith.constant dense<0.000000e+00> : vector<128x128xf32>
    %28 = tpu.matmul %26, %27, %cst_19 {dimension_numbers = #tpu.dot_dimension_numbers<[1], [0], [0], [1], [0, 0, 1, 1], [], []>} : vector<128x128xf32>, vector<128x128xf32>, vector<128x128xf32> -> vector<128x128xf32>
    %c0_20 = arith.constant 0 : index
    %c0_21 = arith.constant 0 : index
    %29 = vector.load %arg8[%c0_20, %c0_21] : memref<1x128xf32, #tpu.memory_space<vmem>>, vector<1x128xf32>
    %30 = vector.broadcast %29 : vector<1x128xf32> to vector<128x128xf32>
    %31 = arith.addf %28, %30 : vector<128x128xf32>
    %cst_22 = arith.constant 0.000000e+00 : f32
    %32 = vector.broadcast %cst_22 : f32 to vector<128x128xf32>
    %33 = arith.maximumf %31, %32 : vector<128x128xf32>
    %34 = vector.extract_strided_slice %25 {offsets = [128, 0], sizes = [128, 128], strides = [1, 1]} : vector<256x128xf32> to vector<128x128xf32>
    %c0_23 = arith.constant 0 : index
    %c0_24 = arith.constant 0 : index
    %35 = vector.load %arg9[%c0_23, %c0_24] : memref<128x128xf32, #tpu.memory_space<vmem>>, vector<128x128xf32>
    %cst_25 = arith.constant dense<0.000000e+00> : vector<128x128xf32>
    %36 = tpu.matmul %34, %35, %cst_25 {dimension_numbers = #tpu.dot_dimension_numbers<[1], [0], [0], [1], [0, 0, 1, 1], [], []>} : vector<128x128xf32>, vector<128x128xf32>, vector<128x128xf32> -> vector<128x128xf32>
    %c0_26 = arith.constant 0 : index
    %c0_27 = arith.constant 0 : index
    %37 = vector.load %arg10[%c0_26, %c0_27] : memref<1x128xf32, #tpu.memory_space<vmem>>, vector<1x128xf32>
    %38 = vector.broadcast %37 : vector<1x128xf32> to vector<128x128xf32>
    %39 = arith.addf %36, %38 : vector<128x128xf32>
    %cst_28 = arith.constant 0.000000e+00 : f32
    %40 = vector.broadcast %cst_28 : f32 to vector<128x128xf32>
    %41 = arith.maximumf %39, %40 : vector<128x128xf32>
    %42 = vector.shape_cast %33 : vector<128x128xf32> to vector<16x8x128xf32>
    %cst_29 = arith.constant dense<0xFF800000> : vector<16x128xf32>
    %43 = vector.multi_reduction <maximumf>, %42, %cst_29 [1] : vector<16x8x128xf32> to vector<16x128xf32>
    %44 = vector.shape_cast %41 : vector<128x128xf32> to vector<16x8x128xf32>
    %cst_30 = arith.constant dense<0xFF800000> : vector<16x128xf32>
    %45 = vector.multi_reduction <maximumf>, %44, %cst_30 [1] : vector<16x8x128xf32> to vector<16x128xf32>
    %46 = arith.addf %43, %45 : vector<16x128xf32>
    %c0_31 = arith.constant 0 : index
    %c0_32 = arith.constant 0 : index
    %47 = vector.load %arg11[%c0_31, %c0_32] : memref<16x128xf32, #tpu.memory_space<vmem>>, vector<16x128xf32>
    tpu.vector_store %arg11[%c0_31, %c0_32], %46 {strides = array<i32>} : memref<16x128xf32, #tpu.memory_space<vmem>>, vector<16x128xf32>,
    return
  }
  func.func @transform_0(%arg0: i32) -> (i32, i32, i32) {
    %c0_i32 = arith.constant 0 : i32
    %c0_i32_0 = arith.constant 0 : i32
    %c0_i32_1 = arith.constant 0 : i32
    return %arg0, %c0_i32, %c0_i32_0 : i32, i32, i32
  }
  func.func @transform_1(%arg0: i32) -> (i32, i32) {
    %c0_i32 = arith.constant 0 : i32
    %c0_i32_0 = arith.constant 0 : i32
    %c0_i32_1 = arith.constant 0 : i32
    return %c0_i32, %c0_i32_0 : i32, i32
  }
  func.func @transform_2(%arg0: i32) -> (i32, i32) {
    %c0_i32 = arith.constant 0 : i32
    %c0_i32_0 = arith.constant 0 : i32
    %c0_i32_1 = arith.constant 0 : i32
    return %c0_i32, %c0_i32_0 : i32, i32
  }
  func.func @transform_3(%arg0: i32) -> (i32, i32) {
    %c0_i32 = arith.constant 0 : i32
    %c0_i32_0 = arith.constant 0 : i32
    %c0_i32_1 = arith.constant 0 : i32
    return %c0_i32, %c0_i32_0 : i32, i32
  }
  func.func @transform_4(%arg0: i32) -> (i32, i32) {
    %c0_i32 = arith.constant 0 : i32
    %c0_i32_0 = arith.constant 0 : i32
    %c0_i32_1 = arith.constant 0 : i32
    return %c0_i32, %c0_i32_0 : i32, i32
  }
  func.func @transform_5(%arg0: i32) -> (i32, i32) {
    %c0_i32 = arith.constant 0 : i32
    %c0_i32_0 = arith.constant 0 : i32
    %c0_i32_1 = arith.constant 0 : i32
    return %c0_i32, %c0_i32_0 : i32, i32
  }
  func.func @transform_6(%arg0: i32) -> (i32, i32) {
    %c0_i32 = arith.constant 0 : i32
    %c0_i32_0 = arith.constant 0 : i32
    %c0_i32_1 = arith.constant 0 : i32
    return %c0_i32, %c0_i32_0 : i32, i32
  }
  func.func @transform_7(%arg0: i32) -> (i32, i32) {
    %c0_i32 = arith.constant 0 : i32
    %c0_i32_0 = arith.constant 0 : i32
    %c0_i32_1 = arith.constant 0 : i32
    return %c0_i32, %c0_i32_0 : i32, i32
  }
  func.func @transform_8(%arg0: i32) -> (i32, i32) {
    %c0_i32 = arith.constant 0 : i32
    %c0_i32_0 = arith.constant 0 : i32
    %c0_i32_1 = arith.constant 0 : i32
    return %c0_i32, %c0_i32_0 : i32, i32
  }
  func.func @transform_9(%arg0: i32) -> (i32, i32) {
    %c0_i32 = arith.constant 0 : i32
    %c0_i32_0 = arith.constant 0 : i32
    %c0_i32_1 = arith.constant 0 : i32
    return %c0_i32, %c0_i32_0 : i32, i32
  }
  func.func @transform_10(%arg0: i32) -> (i32, i32) {
    %c0_i32 = arith.constant 0 : i32
    %c0_i32_0 = arith.constant 0 : i32
    return %arg0, %c0_i32 : i32, i32
  }
}

</mosaic_0001>

<llo_original>
// kernel: custom-call.8
$region0: #{custom-call.8}
  %s0 = inlined_call_operand.vmem [shape: f32[2,64], index: 0, kind: output, shape index: {}]

// kernel: neg.1
$region0: #{neg.1}
  #allocation0 [shape = 's32[1]{0}', space=sflag, size = 0x4, scoped, tag = 'scoped memory for neg.1']
  %s0 = inlined_call_operand.vmem [shape: f32[2,16,64], index: 0, kind: input, shape index: {}]
  %s1 = inlined_call_operand.vmem [shape: f32[2,16,64], index: 1, kind: output, shape index: {}]
  %v2 = vld [vmem:[%s0] sm:$0xff]
  %3 = xla_tuple %v2
  %4 = xla_tuple %3
  %v5 = vxor.u32 %v2, 2147483648
  %6 = xla_tuple %v5
  %7 = vst [vmem:[%s1] sm:$0xff] %v5
  %s8 = scalar_lea.vmem %s0, 16
  %v9 = vld [vmem:[%s8] sm:$0xff]
  %10 = xla_tuple %v9
  %11 = xla_tuple %10
  %v12 = vxor.u32 %v9, 2147483648
  %13 = xla_tuple %v12
  %s14 = scalar_lea.vmem %s1, 16
  %15 = vst [vmem:[%s14] sm:$0xff] %v12
  %s16 = scalar_lea.vmem %s0, 8
  %v17 = vld [vmem:[%s16] sm:$0xff]
  %18 = xla_tuple %v17
  %19 = xla_tuple %18
  %v20 = vxor.u32 %v17, 2147483648
  %21 = xla_tuple %v20
  %s22 = scalar_lea.vmem %s1, 8
  %23 = vst [vmem:[%s22] sm:$0xff] %v20
  %s24 = scalar_lea.vmem %s0, 24
  %v25 = vld [vmem:[%s24] sm:$0xff]
  %26 = xla_tuple %v25
  %27 = xla_tuple %26
  %v28 = vxor.u32 %v25, 2147483648
  %29 = xla_tuple %v28
  %s30 = scalar_lea.vmem %s1, 24
  %31 = vst [vmem:[%s30] sm:$0xff] %v28

// kernel: p3embed_forward.1
$region0: #{p3embed_forward.1}
  #allocation0 [shape = 'u32[]', space=smem, size = 0x4, offset = 0x4, fixed_abs, tag = 'smem constant byte address 0x4 - core index']
  #allocation1 [shape = 'u32[144,128]{1,0:T(1,128)}', space=vmem, size = 0x12000, scoped, tag = 'internal scratch']
  %s0 = inlined_call_operand.vmem [shape: f32[32,8,6], index: 0, kind: input, shape index: {}]
  %s1 = inlined_call_operand.vmem [shape: f32[6,64], index: 1, kind: input, shape index: {}]
  %s2 = inlined_call_operand.vmem [shape: f32[1,64], index: 2, kind: input, shape index: {}]
  %s3 = inlined_call_operand.vmem [shape: f32[64,128], index: 3, kind: input, shape index: {}]
  %s4 = inlined_call_operand.vmem [shape: f32[64,128], index: 4, kind: input, shape index: {}]
  %s5 = inlined_call_operand.vmem [shape: f32[1,128], index: 5, kind: input, shape index: {}]
  %s6 = inlined_call_operand.vmem [shape: f32[128,128], index: 6, kind: input, shape index: {}]
  %s7 = inlined_call_operand.vmem [shape: f32[1,128], index: 7, kind: input, shape index: {}]
  %s8 = inlined_call_operand.vmem [shape: f32[128,128], index: 8, kind: input, shape index: {}]
  %s9 = inlined_call_operand.vmem [shape: f32[1,128], index: 9, kind: input, shape index: {}]
  %s10 = inlined_call_operand.vmem [shape: f32[16,128], index: 10, kind: output, shape index: {}]
  %s11 = sld [smem:[#allocation0]]
  $region50: #{p3embed_forward.1} parent=0
    _
  %s13 = ssub.s32 1, %s11
  %s14 = scalar_select 0, %s13, %s11
  // Predicated region
  $region2: #{p3embed_forward.1} parent=0 // pred_check
    _
  $region3: #{p3embed_forward.1} parent=0 // pred_check_branch
    %16 = sbr.rel (0) target = $region5
  $region4: #{p3embed_forward.1} parent=0 // pred_region
    _
  $region5: #{p3embed_forward.1} parent=0 // pred_fallthru
    _
  // Predicated region
  $region6: #{p3embed_forward.1} parent=0 // pred_check
    _
  $region7: #{p3embed_forward.1} parent=0 // pred_check_branch
    %18 = sbr.rel (0) target = $region9
  $region8: #{p3embed_forward.1} parent=0 // pred_region
    _
  $region9: #{p3embed_forward.1} parent=0 // pred_fallthru
    _
  // Predicated region
  $region10: #{p3embed_forward.1} parent=0 // pred_check
    _
  $region11: #{p3embed_forward.1} parent=0 // pred_check_branch
    %20 = sbr.rel (0) target = $region13
  $region12: #{p3embed_forward.1} parent=0 // pred_region
    _
  $region13: #{p3embed_forward.1} parent=0 // pred_fallthru
    _
  // Predicated region
  $region14: #{p3embed_forward.1} parent=0 // pred_check
    _
  $region15: #{p3embed_forward.1} parent=0 // pred_check_branch
    %22 = sbr.rel (0) target = $region17
  $region16: #{p3embed_forward.1} parent=0 // pred_region
    _
  $region17: #{p3embed_forward.1} parent=0 // pred_fallthru
    _
  // Predicated region
  $region18: #{p3embed_forward.1} parent=0 // pred_check
    _
  $region19: #{p3embed_forward.1} parent=0 // pred_check_branch
    %24 = sbr.rel (0) target = $region21
  $region20: #{p3embed_forward.1} parent=0 // pred_region
    _
  $region21: #{p3embed_forward.1} parent=0 // pred_fallthru
    _
  // Predicated region
  $region22: #{p3embed_forward.1} parent=0 // pred_check
    _
  $region23: #{p3embed_forward.1} parent=0 // pred_check_branch
    %26 = sbr.rel (0) target = $region25
  $region24: #{p3embed_forward.1} parent=0 // pred_region
    _
  $region25: #{p3embed_forward.1} parent=0 // pred_fallthru
    _
  // Predicated region
  $region26: #{p3embed_forward.1} parent=0 // pred_check
    _
  $region27: #{p3embed_forward.1} parent=0 // pred_check_branch
    %28 = sbr.rel (0) target = $region29
  $region28: #{p3embed_forward.1} parent=0 // pred_region
    _
  $region29: #{p3embed_forward.1} parent=0 // pred_fallthru
    _
  // Predicated region
  $region30: #{p3embed_forward.1} parent=0 // pred_check
    _
  $region31: #{p3embed_forward.1} parent=0 // pred_check_branch
    %30 = sbr.rel (0) target = $region33
  $region32: #{p3embed_forward.1} parent=0 // pred_region
    _
  $region33: #{p3embed_forward.1} parent=0 // pred_fallthru
    _
  // Predicated region
  $region34: #{p3embed_forward.1} parent=0 // pred_check
    _
  $region35: #{p3embed_forward.1} parent=0 // pred_check_branch
    %32 = sbr.rel (0) target = $region37
  $region36: #{p3embed_forward.1} parent=0 // pred_region
    _
  $region37: #{p3embed_forward.1} parent=0 // pred_fallthru
    _
  // Predicated region
  $region38: #{p3embed_forward.1} parent=0 // pred_check
    _
  $region39: #{p3embed_forward.1} parent=0 // pred_check_branch
    %34 = sbr.rel (0) target = $region41
  $region40: #{p3embed_forward.1} parent=0 // pred_region
    _
  $region41: #{p3embed_forward.1} parent=0 // pred_fallthru
    _
  %v35 = vld [vmem:[%s0] sm:$0xff]
  %v36 = vld [vmem:[%s0 + $0x8] sm:$0xff]
  %v37 = vld [vmem:[%s0 + $0x10] sm:$0xff]
  %v38 = vld [vmem:[%s0 + $0x18] sm:$0xff]
  %v39 = vld [vmem:[%s0 + $0x20] sm:$0xff]
  %v40 = vld [vmem:[%s0 + $0x28] sm:$0xff]
  %v41 = vld [vmem:[%s0 + $0x30] sm:$0xff]
  %v42 = vld [vmem:[%s0 + $0x38] sm:$0xff]
  %v43 = vld [vmem:[%s0 + $0x40] sm:$0xff]
  %v44 = vld [vmem:[%s0 + $0x48] sm:$0xff]
  %v45 = vld [vmem:[%s0 + $0x50] sm:$0xff]
  %v46 = vld [vmem:[%s0 + $0x58] sm:$0xff]
  %v47 = vld [vmem:[%s0 + $0x60] sm:$0xff]
  %v48 = vld [vmem:[%s0 + $0x68] sm:$0xff]
  %v49 = vld [vmem:[%s0 + $0x70] sm:$0xff]
  %v50 = vld [vmem:[%s0 + $0x78] sm:$0xff]
  %v51 = vld [vmem:[%s0 + $0x80] sm:$0xff]
  %v52 = vld [vmem:[%s0 + $0x88] sm:$0xff]
  %v53 = vld [vmem:[%s0 + $0x90] sm:$0xff]
  %v54 = vld [vmem:[%s0 + $0x98] sm:$0xff]
  %v55 = vld [vmem:[%s0 + $0xa0] sm:$0xff]
  %v56 = vld [vmem:[%s0 + $0xa8] sm:$0xff]
  %v57 = vld [vmem:[%s0 + $0xb0] sm:$0xff]
  %v58 = vld [vmem:[%s0 + $0xb8] sm:$0xff]
  %v59 = vld [vmem:[%s0 + $0xc0] sm:$0xff]
  %v60 = vld [vmem:[%s0 + $0xc8] sm:$0xff]
  %v61 = vld [vmem:[%s0 + $0xd0] sm:$0xff]
  %v62 = vld [vmem:[%s0 + $0xd8] sm:$0xff]
  %v63 = vld [vmem:[%s0 + $0xe0] sm:$0xff]
  %v64 = vld [vmem:[%s0 + $0xe8] sm:$0xff]
  %v65 = vld [vmem:[%s0 + $0xf0] sm:$0xff]
  %v66 = vld [vmem:[%s0 + $0xf8] sm:$0xff]
  %v67 = vld [vmem:[%s1] sm:$0x3f]
  %v68 = vld [vmem:[%s2] sm:$0x1]
  %v70 = vlaneseq
  %v71 = vshrl.u32 %v70, 7
  %v72 = vsub.s32 0, %v71
  %v73 = vrot.slane %v68, %v72
  %vm75 = vcmask 48128
  %v77 = vsel %vm75, %v35, 0
  %v80 = vsel %vm75, %v36, 0
  %v83 = vsel %vm75, %v37, 0
  %v86 = vsel %vm75, %v38, 0
  %v89 = vsel %vm75, %v39, 0
  %v92 = vsel %vm75, %v40, 0
  %v95 = vsel %vm75, %v41, 0
  %v98 = vsel %vm75, %v42, 0
  %v101 = vsel %vm75, %v43, 0
  %v104 = vsel %vm75, %v44, 0
  %v107 = vsel %vm75, %v45, 0
  %v110 = vsel %vm75, %v46, 0
  %v113 = vsel %vm75, %v47, 0
  %v116 = vsel %vm75, %v48, 0
  %v119 = vsel %vm75, %v49, 0
  %v122 = vsel %vm75, %v50, 0
  %v125 = vsel %vm75, %v51, 0
  %v128 = vsel %vm75, %v52, 0
  %v131 = vsel %vm75, %v53, 0
  %v134 = vsel %vm75, %v54, 0
  %v137 = vsel %vm75, %v55, 0
  %v140 = vsel %vm75, %v56, 0
  %v143 = vsel %vm75, %v57, 0
  %v146 = vsel %vm75, %v58, 0
  %v149 = vsel %vm75, %v59, 0
  %v152 = vsel %vm75, %v60, 0
  %v155 = vsel %vm75, %v61, 0
  %v158 = vsel %vm75, %v62, 0
  %v161 = vsel %vm75, %v63, 0
  %v164 = vsel %vm75, %v64, 0
  %v167 = vsel %vm75, %v65, 0
  %v170 = vsel %vm75, %v66, 0
  %vm172 = vcmask 1045504
  %v174 = vsel %vm172, %v67, 0
  %176 = vmatprep.subr.mxu0 0.0
  %177 = vmatpush1.msra.mxu0 %v174
  %178 = vmatprep.subr.mxu0 0.0
  %179 = vmatpush1.msra.mxu0 0.0
  %180 = vmatprep.subr.mxu0 0.0
  %181 = vmatpush1.msra.mxu0 0.0
  %182 = vmatprep.subr.mxu0 0.0
  %183 = vmatpush1.msra.mxu0 0.0
  %184 = vmatprep.subr.mxu0 0.0
  %185 = vmatpush1.msra.mxu0 0.0
  %186 = vmatprep.subr.mxu0 0.0
  %187 = vmatpush1.msra.mxu0 0.0
  %188 = vmatprep.subr.mxu0 0.0
  %189 = vmatpush1.msra.mxu0 0.0
  %190 = vmatprep.subr.mxu0 0.0
  %191 = vmatpush1.msra.mxu0 0.0
  %192 = vmatprep.subr.mxu0 0.0
  %193 = vmatpush1.msra.mxu0 0.0
  %194 = vmatprep.subr.mxu0 0.0
  %195 = vmatpush1.msra.mxu0 0.0
  %196 = vmatprep.subr.mxu0 0.0
  %197 = vmatpush1.msra.mxu0 0.0
  %198 = vmatprep.subr.mxu0 0.0
  %199 = vmatpush1.msra.mxu0 0.0
  %200 = vmatprep.subr.mxu0 0.0
  %201 = vmatpush1.msra.mxu0 0.0
  %202 = vmatprep.subr.mxu0 0.0
  %203 = vmatpush1.msra.mxu0 0.0
  %204 = vmatprep.subr.mxu0 0.0
  %205 = vmatpush1.msra.mxu0 0.0
  %206 = vmatprep.subr.mxu0 0.0
  %207 = vmatpush1.msra.mxu0 0.0
  %208 = vmatprep.subr.mxu0 0.0
  %209 = vmatpush1.msra.mxu0 0.0
  %210 = vmatprep.subr.mxu0 0.0
  %211 = vmatpush1.msra.mxu0 0.0
  %212 = vmatprep.subr.mxu0 0.0
  %213 = vmatpush1.msra.mxu0 0.0
  %214 = vmatprep.subr.mxu0 0.0
  %215 = vmatpush1.msra.mxu0 0.0
  %216 = vmatprep.subr.mxu0 0.0
  %217 = vmatpush1.msra.mxu0 0.0
  %218 = vmatprep.subr.mxu0 0.0
  %219 = vmatpush1.msra.mxu0 0.0
  %220 = vmatprep.subr.mxu0 0.0
  %221 = vmatpush1.msra.mxu0 0.0
  %222 = vmatprep.subr.mxu0 0.0
  %223 = vmatpush1.msra.mxu0 0.0
  %224 = vmatprep.subr.mxu0 0.0
  %225 = vmatpush1.msra.mxu0 0.0
  %226 = vmatprep.subr.mxu0 0.0
  %227 = vmatpush1.msra.mxu0 0.0
  %228 = vmatprep.subr.mxu0 0.0
  %229 = vmatpush1.msra.mxu0 0.0
  %230 = vmatprep.subr.mxu0 0.0
  %231 = vmatpush1.msra.mxu0 0.0
  %232 = vmatprep.subr.mxu0 0.0
  %233 = vmatpush1.msra.mxu0 0.0
  %234 = vmatprep.subr.mxu0 0.0
  %235 = vmatpush1.msra.mxu0 0.0
  %236 = vmatprep.subr.mxu0 0.0
  %237 = vmatpush1.msra.mxu0 0.0
  %238 = vmatprep.subr.mxu0 0.0
  %239 = vmatpush1.msra.mxu0 0.0
  %240 = vmatprep.mubr.f32.mxu0 0.0
  %241 = vmatmul.mubr.f32.gmra.mrb[0].mxu0 %v77
  %v242 = vpop.f32.mrb[0].mxu0
  %v243 = vadd.f32 %v73, %v242
  %v244 = vpop.f32.mrb[0].mxu0
  %245 = vmatprep.mubr.f32.mxu0 0.0
  %246 = vmatmul.mubr.f32.gmra.mrb[0].mxu0 %v80
  %v247 = vpop.f32.mrb[0].mxu0
  %v248 = vadd.f32 %v73, %v247
  %v249 = vpop.f32.mrb[0].mxu0
  %250 = vmatprep.mubr.f32.mxu0 0.0
  %251 = vmatmul.mubr.f32.gmra.mrb[0].mxu0 %v83
  %v252 = vpop.f32.mrb[0].mxu0
  %v253 = vadd.f32 %v73, %v252
  %v254 = vpop.f32.mrb[0].mxu0
  %255 = vmatprep.mubr.f32.mxu0 0.0
  %256 = vmatmul.mubr.f32.gmra.mrb[0].mxu0 %v86
  %v257 = vpop.f32.mrb[0].mxu0
  %v258 = vadd.f32 %v73, %v257
  %v259 = vpop.f32.mrb[0].mxu0
  %260 = vmatprep.mubr.f32.mxu0 0.0
  %261 = vmatmul.mubr.f32.gmra.mrb[0].mxu0 %v89
  %v262 = vpop.f32.mrb[0].mxu0
  %v263 = vadd.f32 %v73, %v262
  %v264 = vpop.f32.mrb[0].mxu0
  %265 = vmatprep.mubr.f32.mxu0 0.0
  %266 = vmatmul.mubr.f32.gmra.mrb[0].mxu0 %v92
  %v267 = vpop.f32.mrb[0].mxu0
  %v268 = vadd.f32 %v73, %v267
  %v269 = vpop.f32.mrb[0].mxu0
  %270 = vmatprep.mubr.f32.mxu0 0.0
  %271 = vmatmul.mubr.f32.gmra.mrb[0].mxu0 %v95
  %v272 = vpop.f32.mrb[0].mxu0
  %v273 = vadd.f32 %v73, %v272
  %v274 = vpop.f32.mrb[0].mxu0
  %275 = vmatprep.mubr.f32.mxu0 0.0
  %276 = vmatmul.mubr.f32.gmra.mrb[0].mxu0 %v98
  %v277 = vpop.f32.mrb[0].mxu0
  %v278 = vadd.f32 %v73, %v277
  %v279 = vpop.f32.mrb[0].mxu0
  %280 = vmatprep.mubr.f32.mxu0 0.0
  %281 = vmatmul.mubr.f32.gmra.mrb[0].mxu0 %v101
  %v282 = vpop.f32.mrb[0].mxu0
  %v283 = vadd.f32 %v73, %v282
  %v284 = vpop.f32.mrb[0].mxu0
  %285 = vmatprep.mubr.f32.mxu0 0.0
  %286 = vmatmul.mubr.f32.gmra.mrb[0].mxu0 %v104
  %v287 = vpop.f32.mrb[0].mxu0
  %v288 = vadd.f32 %v73, %v287
  %v289 = vpop.f32.mrb[0].mxu0
  %290 = vmatprep.mubr.f32.mxu0 0.0
  %291 = vmatmul.mubr.f32.gmra.mrb[0].mxu0 %v107
  %v292 = vpop.f32.mrb[0].mxu0
  %v293 = vadd.f32 %v73, %v292
  %v294 = vpop.f32.mrb[0].mxu0
  %295 = vmatprep.mubr.f32.mxu0 0.0
  %296 = vmatmul.mubr.f32.gmra.mrb[0].mxu0 %v110
  %v297 = vpop.f32.mrb[0].mxu0
  %v298 = vadd.f32 %v73, %v297
  %v299 = vpop.f32.mrb[0].mxu0
  %300 = vmatprep.mubr.f32.mxu0 0.0
  %301 = vmatmul.mubr.f32.gmra.mrb[0].mxu0 %v113
  %v302 = vpop.f32.mrb[0].mxu0
  %v303 = vadd.f32 %v73, %v302
  %v304 = vpop.f32.mrb[0].mxu0
  %305 = vmatprep.mubr.f32.mxu0 0.0
  %306 = vmatmul.mubr.f32.gmra.mrb[0].mxu0 %v116
  %v307 = vpop.f32.mrb[0].mxu0
  %v308 = vadd.f32 %v73, %v307
  %v309 = vpop.f32.mrb[0].mxu0
  %310 = vmatprep.mubr.f32.mxu0 0.0
  %311 = vmatmul.mubr.f32.gmra.mrb[0].mxu0 %v119
  %v312 = vpop.f32.mrb[0].mxu0
  %v313 = vadd.f32 %v73, %v312
  %v314 = vpop.f32.mrb[0].mxu0
  %315 = vmatprep.mubr.f32.mxu0 0.0
  %316 = vmatmul.mubr.f32.gmra.mrb[0].mxu0 %v122
  %v317 = vpop.f32.mrb[0].mxu0
  %v318 = vadd.f32 %v73, %v317
  %v319 = vpop.f32.mrb[0].mxu0
  %320 = vmatprep.mubr.f32.mxu0 0.0
  %321 = vmatmul.mubr.f32.gmra.mrb[0].mxu0 %v125
  %v322 = vpop.f32.mrb[0].mxu0
  %v323 = vadd.f32 %v73, %v322
  %v324 = vpop.f32.mrb[0].mxu0
  %325 = vmatprep.mubr.f32.mxu0 0.0
  %326 = vmatmul.mubr.f32.gmra.mrb[0].mxu0 %v128
  %v327 = vpop.f32.mrb[0].mxu0
  %v328 = vadd.f32 %v73, %v327
  %v329 = vpop.f32.mrb[0].mxu0
  %330 = vmatprep.mubr.f32.mxu0 0.0
  %331 = vmatmul.mubr.f32.gmra.mrb[0].mxu0 %v131
  %v332 = vpop.f32.mrb[0].mxu0
  %v333 = vadd.f32 %v73, %v332
  %v334 = vpop.f32.mrb[0].mxu0
  %335 = vmatprep.mubr.f32.mxu0 0.0
  %336 = vmatmul.mubr.f32.gmra.mrb[0].mxu0 %v134
  %v337 = vpop.f32.mrb[0].mxu0
  %v338 = vadd.f32 %v73, %v337
  %v339 = vpop.f32.mrb[0].mxu0
  %340 = vmatprep.mubr.f32.mxu0 0.0
  %341 = vmatmul.mubr.f32.gmra.mrb[0].mxu0 %v137
  %v342 = vpop.f32.mrb[0].mxu0
  %v343 = vadd.f32 %v73, %v342
  %v344 = vpop.f32.mrb[0].mxu0
  %345 = vmatprep.mubr.f32.mxu0 0.0
  %346 = vmatmul.mubr.f32.gmra.mrb[0].mxu0 %v140
  %v347 = vpop.f32.mrb[0].mxu0
  %v348 = vadd.f32 %v73, %v347
  %v349 = vpop.f32.mrb[0].mxu0
  %350 = vmatprep.mubr.f32.mxu0 0.0
  %351 = vmatmul.mubr.f32.gmra.mrb[0].mxu0 %v143
  %v352 = vpop.f32.mrb[0].mxu0
  %v353 = vadd.f32 %v73, %v352
  %v354 = vpop.f32.mrb[0].mxu0
  %355 = vmatprep.mubr.f32.mxu0 0.0
  %356 = vmatmul.mubr.f32.gmra.mrb[0].mxu0 %v146
  %v357 = vpop.f32.mrb[0].mxu0
  %v358 = vadd.f32 %v73, %v357
  %v359 = vpop.f32.mrb[0].mxu0
  %360 = vmatprep.mubr.f32.mxu0 0.0
  %361 = vmatmul.mubr.f32.gmra.mrb[0].mxu0 %v149
  %v362 = vpop.f32.mrb[0].mxu0
  %v363 = vadd.f32 %v73, %v362
  %v364 = vpop.f32.mrb[0].mxu0
  %365 = vmatprep.mubr.f32.mxu0 0.0
  %366 = vmatmul.mubr.f32.gmra.mrb[0].mxu0 %v152
  %v367 = vpop.f32.mrb[0].mxu0
  %v368 = vadd.f32 %v73, %v367
  %v369 = vpop.f32.mrb[0].mxu0
  %370 = vmatprep.mubr.f32.mxu0 0.0
  %371 = vmatmul.mubr.f32.gmra.mrb[0].mxu0 %v155
  %v372 = vpop.f32.mrb[0].mxu0
  %v373 = vadd.f32 %v73, %v372
  %v374 = vpop.f32.mrb[0].mxu0
  %375 = vmatprep.mubr.f32.mxu0 0.0
  %376 = vmatmul.mubr.f32.gmra.mrb[0].mxu0 %v158
  %v377 = vpop.f32.mrb[0].mxu0
  %v378 = vadd.f32 %v73, %v377
  %v379 = vpop.f32.mrb[0].mxu0
  %380 = vmatprep.mubr.f32.mxu0 0.0
  %381 = vmatmul.mubr.f32.gmra.mrb[0].mxu0 %v161
  %v382 = vpop.f32.mrb[0].mxu0
  %v383 = vadd.f32 %v73, %v382
  %v384 = vpop.f32.mrb[0].mxu0
  %385 = vmatprep.mubr.f32.mxu0 0.0
  %386 = vmatmul.mubr.f32.gmra.mrb[0].mxu0 %v164
  %v387 = vpop.f32.mrb[0].mxu0
  %v388 = vadd.f32 %v73, %v387
  %v389 = vpop.f32.mrb[0].mxu0
  %390 = vmatprep.mubr.f32.mxu0 0.0
  %391 = vmatmul.mubr.f32.gmra.mrb[0].mxu0 %v167
  %v392 = vpop.f32.mrb[0].mxu0
  %v393 = vadd.f32 %v73, %v392
  %v394 = vpop.f32.mrb[0].mxu0
  %395 = vmatprep.mubr.f32.mxu0 0.0
  %396 = vmatmul.mubr.f32.gmra.mrb[0].mxu0 %v170
  %v397 = vpop.f32.mrb[0].mxu0
  %v398 = vadd.f32 %v73, %v397
  %v399 = vpop.f32.mrb[0].mxu0
  %400 = vdwg.mxu0
  %v401 = vmax.f32 %v243, 0.0
  %v402 = vmax.f32 %v248, 0.0
  %v403 = vmax.f32 %v253, 0.0
  %v404 = vmax.f32 %v258, 0.0
  %v405 = vmax.f32 %v263, 0.0
  %v406 = vmax.f32 %v268, 0.0
  %v407 = vmax.f32 %v273, 0.0
  %v408 = vmax.f32 %v278, 0.0
  %v409 = vmax.f32 %v283, 0.0
  %v410 = vmax.f32 %v288, 0.0
  %v411 = vmax.f32 %v293, 0.0
  %v412 = vmax.f32 %v298, 0.0
  %v413 = vmax.f32 %v303, 0.0
  %v414 = vmax.f32 %v308, 0.0
  %v415 = vmax.f32 %v313, 0.0
  %v416 = vmax.f32 %v318, 0.0
  %v417 = vmax.f32 %v323, 0.0
  %v418 = vmax.f32 %v328, 0.0
  %v419 = vmax.f32 %v333, 0.0
  %v420 = vmax.f32 %v338, 0.0
  %v421 = vmax.f32 %v343, 0.0
  %v422 = vmax.f32 %v348, 0.0
  %v423 = vmax.f32 %v353, 0.0
  %v424 = vmax.f32 %v358, 0.0
  %v425 = vmax.f32 %v363, 0.0
  %v426 = vmax.f32 %v368, 0.0
  %v427 = vmax.f32 %v373, 0.0
  %v428 = vmax.f32 %v378, 0.0
  %v429 = vmax.f32 %v383, 0.0
  %v430 = vmax.f32 %v388, 0.0
  %v431 = vmax.f32 %v393, 0.0
  %v432 = vmax.f32 %v398, 0.0
  %vm433 = vcmask 523264
  %v434 = vsel %vm433, %v401, -inf
  %v435 = vrot.slane %v434, 4
  %v436 = vmax.f32 %v434, %v435
  %v437 = vrot.slane %v436, 2
  %v438 = vmax.f32 %v436, %v437
  %v439 = vrot.slane %v438, 1
  %v440 = vmax.f32 %v438, %v439
  %v441 = vsel %vm433, %v402, -inf
  %v442 = vrot.slane %v441, 4
  %v443 = vmax.f32 %v441, %v442
  %v444 = vrot.slane %v443, 2
  %v445 = vmax.f32 %v443, %v444
  %v446 = vrot.slane %v445, 1
  %v447 = vmax.f32 %v445, %v446
  %v448 = vsel %vm433, %v403, -inf
  %v449 = vrot.slane %v448, 4
  %v450 = vmax.f32 %v448, %v449
  %v451 = vrot.slane %v450, 2
  %v452 = vmax.f32 %v450, %v451
  %v453 = vrot.slane %v452, 1
  %v454 = vmax.f32 %v452, %v453
  %v455 = vsel %vm433, %v404, -inf
  %v456 = vrot.slane %v455, 4
  %v457 = vmax.f32 %v455, %v456
  %v458 = vrot.slane %v457, 2
  %v459 = vmax.f32 %v457, %v458
  %v460 = vrot.slane %v459, 1
  %v461 = vmax.f32 %v459, %v460
  %v462 = vsel %vm433, %v405, -inf
  %v463 = vrot.slane %v462, 4
  %v464 = vmax.f32 %v462, %v463
  %v465 = vrot.slane %v464, 2
  %v466 = vmax.f32 %v464, %v465
  %v467 = vrot.slane %v466, 1
  %v468 = vmax.f32 %v466, %v467
  %v469 = vsel %vm433, %v406, -inf
  %v470 = vrot.slane %v469, 4
  %v471 = vmax.f32 %v469, %v470
  %v472 = vrot.slane %v471, 2
  %v473 = vmax.f32 %v471, %v472
  %v474 = vrot.slane %v473, 1
  %v475 = vmax.f32 %v473, %v474
  %v476 = vsel %vm433, %v407, -inf
  %v477 = vrot.slane %v476, 4
  %v478 = vmax.f32 %v476, %v477
  %v479 = vrot.slane %v478, 2
  %v480 = vmax.f32 %v478, %v479
  %v481 = vrot.slane %v480, 1
  %v482 = vmax.f32 %v480, %v481
  %v483 = vsel %vm433, %v408, -inf
  %v484 = vrot.slane %v483, 4
  %v485 = vmax.f32 %v483, %v484
  %v486 = vrot.slane %v485, 2
  %v487 = vmax.f32 %v485, %v486
  %v488 = vrot.slane %v487, 1
  %v489 = vmax.f32 %v487, %v488
  %v490 = vsel %vm433, %v409, -inf
  %v491 = vrot.slane %v490, 4
  %v492 = vmax.f32 %v490, %v491
  %v493 = vrot.slane %v492, 2
  %v494 = vmax.f32 %v492, %v493
  %v495 = vrot.slane %v494, 1
  %v496 = vmax.f32 %v494, %v495
  %v497 = vsel %vm433, %v410, -inf
  %v498 = vrot.slane %v497, 4
  %v499 = vmax.f32 %v497, %v498
  %v500 = vrot.slane %v499, 2
  %v501 = vmax.f32 %v499, %v500
  %v502 = vrot.slane %v501, 1
  %v503 = vmax.f32 %v501, %v502
  %v504 = vsel %vm433, %v411, -inf
  %v505 = vrot.slane %v504, 4
  %v506 = vmax.f32 %v504, %v505
  %v507 = vrot.slane %v506, 2
  %v508 = vmax.f32 %v506, %v507
  %v509 = vrot.slane %v508, 1
  %v510 = vmax.f32 %v508, %v509
  %v511 = vsel %vm433, %v412, -inf
  %v512 = vrot.slane %v511, 4
  %v513 = vmax.f32 %v511, %v512
  %v514 = vrot.slane %v513, 2
  %v515 = vmax.f32 %v513, %v514
  %v516 = vrot.slane %v515, 1
  %v517 = vmax.f32 %v515, %v516
  %v518 = vsel %vm433, %v413, -inf
  %v519 = vrot.slane %v518, 4
  %v520 = vmax.f32 %v518, %v519
  %v521 = vrot.slane %v520, 2
  %v522 = vmax.f32 %v520, %v521
  %v523 = vrot.slane %v522, 1
  %v524 = vmax.f32 %v522, %v523
  %v525 = vsel %vm433, %v414, -inf
  %v526 = vrot.slane %v525, 4
  %v527 = vmax.f32 %v525, %v526
  %v528 = vrot.slane %v527, 2
  %v529 = vmax.f32 %v527, %v528
  %v530 = vrot.slane %v529, 1
  %v531 = vmax.f32 %v529, %v530
  %v532 = vsel %vm433, %v415, -inf
  %v533 = vrot.slane %v532, 4
  %v534 = vmax.f32 %v532, %v533
  %v535 = vrot.slane %v534, 2
  %v536 = vmax.f32 %v534, %v535
  %v537 = vrot.slane %v536, 1
  %v538 = vmax.f32 %v536, %v537
  %v539 = vsel %vm433, %v416, -inf
  %v540 = vrot.slane %v539, 4
  %v541 = vmax.f32 %v539, %v540
  %v542 = vrot.slane %v541, 2
  %v543 = vmax.f32 %v541, %v542
  %v544 = vrot.slane %v543, 1
  %v545 = vmax.f32 %v543, %v544
  %v546 = vsel %vm433, %v417, -inf
  %v547 = vrot.slane %v546, 4
  %v548 = vmax.f32 %v546, %v547
  %v549 = vrot.slane %v548, 2
  %v550 = vmax.f32 %v548, %v549
  %v551 = vrot.slane %v550, 1
  %v552 = vmax.f32 %v550, %v551
  %v553 = vsel %vm433, %v418, -inf
  %v554 = vrot.slane %v553, 4
  %v555 = vmax.f32 %v553, %v554
  %v556 = vrot.slane %v555, 2
  %v557 = vmax.f32 %v555, %v556
  %v558 = vrot.slane %v557, 1
  %v559 = vmax.f32 %v557, %v558
  %v560 = vsel %vm433, %v419, -inf
  %v561 = vrot.slane %v560, 4
  %v562 = vmax.f32 %v560, %v561
  %v563 = vrot.slane %v562, 2
  %v564 = vmax.f32 %v562, %v563
  %v565 = vrot.slane %v564, 1
  %v566 = vmax.f32 %v564, %v565
  %v567 = vsel %vm433, %v420, -inf
  %v568 = vrot.slane %v567, 4
  %v569 = vmax.f32 %v567, %v568
  %v570 = vrot.slane %v569, 2
  %v571 = vmax.f32 %v569, %v570
  %v572 = vrot.slane %v571, 1
  %v573 = vmax.f32 %v571, %v572
  %v574 = vsel %vm433, %v421, -inf
  %v575 = vrot.slane %v574, 4
  %v576 = vmax.f32 %v574, %v575
  %v577 = vrot.slane %v576, 2
  %v578 = vmax.f32 %v576, %v577
  %v579 = vrot.slane %v578, 1
  %v580 = vmax.f32 %v578, %v579
  %v581 = vsel %vm433, %v422, -inf
  %v582 = vrot.slane %v581, 4
  %v583 = vmax.f32 %v581, %v582
  %v584 = vrot.slane %v583, 2
  %v585 = vmax.f32 %v583, %v584
  %v586 = vrot.slane %v585, 1
  %v587 = vmax.f32 %v585, %v586
  %v588 = vsel %vm433, %v423, -inf
  %v589 = vrot.slane %v588, 4
  %v590 = vmax.f32 %v588, %v589
  %v591 = vrot.slane %v590, 2
  %v592 = vmax.f32 %v590, %v591
  %v593 = vrot.slane %v592, 1
  %v594 = vmax.f32 %v592, %v593
  %v595 = vsel %vm433, %v424, -inf
  %v596 = vrot.slane %v595, 4
  %v597 = vmax.f32 %v595, %v596
  %v598 = vrot.slane %v597, 2
  %v599 = vmax.f32 %v597, %v598
  %v600 = vrot.slane %v599, 1
  %v601 = vmax.f32 %v599, %v600
  %v602 = vsel %vm433, %v425, -inf
  %v603 = vrot.slane %v602, 4
  %v604 = vmax.f32 %v602, %v603
  %v605 = vrot.slane %v604, 2
  %v606 = vmax.f32 %v604, %v605
  %v607 = vrot.slane %v606, 1
  %v608 = vmax.f32 %v606, %v607
  %v609 = vsel %vm433, %v426, -inf
  %v610 = vrot.slane %v609, 4
  %v611 = vmax.f32 %v609, %v610
  %v612 = vrot.slane %v611, 2
  %v613 = vmax.f32 %v611, %v612
  %v614 = vrot.slane %v613, 1
  %v615 = vmax.f32 %v613, %v614
  %v616 = vsel %vm433, %v427, -inf
  %v617 = vrot.slane %v616, 4
  %v618 = vmax.f32 %v616, %v617
  %v619 = vrot.slane %v618, 2
  %v620 = vmax.f32 %v618, %v619
  %v621 = vrot.slane %v620, 1
  %v622 = vmax.f32 %v620, %v621
  %v623 = vsel %vm433, %v428, -inf
  %v624 = vrot.slane %v623, 4
  %v625 = vmax.f32 %v623, %v624
  %v626 = vrot.slane %v625, 2
  %v627 = vmax.f32 %v625, %v626
  %v628 = vrot.slane %v627, 1
  %v629 = vmax.f32 %v627, %v628
  %v630 = vsel %vm433, %v429, -inf
  %v631 = vrot.slane %v630, 4
  %v632 = vmax.f32 %v630, %v631
  %v633 = vrot.slane %v632, 2
  %v634 = vmax.f32 %v632, %v633
  %v635 = vrot.slane %v634, 1
  %v636 = vmax.f32 %v634, %v635
  %v637 = vsel %vm433, %v430, -inf
  %v638 = vrot.slane %v637, 4
  %v639 = vmax.f32 %v637, %v638
  %v640 = vrot.slane %v639, 2
  %v641 = vmax.f32 %v639, %v640
  %v642 = vrot.slane %v641, 1
  %v643 = vmax.f32 %v641, %v642
  %v644 = vsel %vm433, %v431, -inf
  %v645 = vrot.slane %v644, 4
  %v646 = vmax.f32 %v644, %v645
  %v647 = vrot.slane %v646, 2
  %v648 = vmax.f32 %v646, %v647
  %v649 = vrot.slane %v648, 1
  %v650 = vmax.f32 %v648, %v649
  %v651 = vsel %vm433, %v432, -inf
  %v652 = vrot.slane %v651, 4
  %v653 = vmax.f32 %v651, %v652
  %v654 = vrot.slane %v653, 2
  %v655 = vmax.f32 %v653, %v654
  %v656 = vrot.slane %v655, 1
  %v657 = vmax.f32 %v655, %v656
  %v658 = vld [vmem:[%s4] sm:$0xff]
  %v659 = vld [vmem:[%s4 + $0x8] sm:$0xff]
  %v660 = vld [vmem:[%s4 + $0x10] sm:$0xff]
  %v661 = vld [vmem:[%s4 + $0x18] sm:$0xff]
  %v662 = vld [vmem:[%s4 + $0x20] sm:$0xff]
  %v663 = vld [vmem:[%s4 + $0x28] sm:$0xff]
  %v664 = vld [vmem:[%s4 + $0x30] sm:$0xff]
  %v665 = vld [vmem:[%s4 + $0x38] sm:$0xff]
  %v667 = vsel %vm433, %v401, 0
  %v670 = vsel %vm433, %v402, 0
  %v673 = vsel %vm433, %v403, 0
  %v676 = vsel %vm433, %v404, 0
  %v679 = vsel %vm433, %v405, 0
  %v682 = vsel %vm433, %v406, 0
  %v685 = vsel %vm433, %v407, 0
  %v688 = vsel %vm433, %v408, 0
  %v691 = vsel %vm433, %v409, 0
  %v694 = vsel %vm433, %v410, 0
  %v697 = vsel %vm433, %v411, 0
  %v700 = vsel %vm433, %v412, 0
  %v703 = vsel %vm433, %v413, 0
  %v706 = vsel %vm433, %v414, 0
  %v709 = vsel %vm433, %v415, 0
  %v712 = vsel %vm433, %v416, 0
  %v715 = vsel %vm433, %v417, 0
  %v718 = vsel %vm433, %v418, 0
  %v721 = vsel %vm433, %v419, 0
  %v724 = vsel %vm433, %v420, 0
  %v727 = vsel %vm433, %v421, 0
  %v730 = vsel %vm433, %v422, 0
  %v733 = vsel %vm433, %v423, 0
  %v736 = vsel %vm433, %v424, 0
  %v739 = vsel %vm433, %v425, 0
  %v742 = vsel %vm433, %v426, 0
  %v745 = vsel %vm433, %v427, 0
  %v748 = vsel %vm433, %v428, 0
  %v751 = vsel %vm433, %v429, 0
  %v754 = vsel %vm433, %v430, 0
  %v757 = vsel %vm433, %v431, 0
  %v760 = vsel %vm433, %v432, 0
  %762 = vmatprep.subr.mxu0 0.0
  %763 = vmatpush1.msra.mxu0 %v658
  %764 = vmatprep.subr.mxu0 0.0
  %765 = vmatpush1.msra.mxu0 %v659
  %766 = vmatprep.subr.mxu0 0.0
  %767 = vmatpush1.msra.mxu0 %v660
  %768 = vmatprep.subr.mxu0 0.0
  %769 = vmatpush1.msra.mxu0 %v661
  %770 = vmatprep.subr.mxu0 0.0
  %771 = vmatpush1.msra.mxu0 %v662
  %772 = vmatprep.subr.mxu0 0.0
  %773 = vmatpush1.msra.mxu0 %v663
  %774 = vmatprep.subr.mxu0 0.0
  %775 = vmatpush1.msra.mxu0 %v664
  %776 = vmatprep.subr.mxu0 0.0
  %777 = vmatpush1.msra.mxu0 %v665
  %778 = vmatprep.subr.mxu0 0.0
  %779 = vmatpush1.msra.mxu0 0.0
  %780 = vmatprep.subr.mxu0 0.0
  %781 = vmatpush1.msra.mxu0 0.0
  %782 = vmatprep.subr.mxu0 0.0
  %783 = vmatpush1.msra.mxu0 0.0
  %784 = vmatprep.subr.mxu0 0.0
  %785 = vmatpush1.msra.mxu0 0.0
  %786 = vmatprep.subr.mxu0 0.0
  %787 = vmatpush1.msra.mxu0 0.0
  %788 = vmatprep.subr.mxu0 0.0
  %789 = vmatpush1.msra.mxu0 0.0
  %790 = vmatprep.subr.mxu0 0.0
  %791 = vmatpush1.msra.mxu0 0.0
  %792 = vmatprep.subr.mxu0 0.0
  %793 = vmatpush1.msra.mxu0 0.0
  %794 = vmatprep.subr.mxu0 0.0
  %795 = vmatpush1.msra.mxu0 0.0
  %796 = vmatprep.subr.mxu0 0.0
  %797 = vmatpush1.msra.mxu0 0.0
  %798 = vmatprep.subr.mxu0 0.0
  %799 = vmatpush1.msra.mxu0 0.0
  %800 = vmatprep.subr.mxu0 0.0
  %801 = vmatpush1.msra.mxu0 0.0
  %802 = vmatprep.subr.mxu0 0.0
  %803 = vmatpush1.msra.mxu0 0.0
  %804 = vmatprep.subr.mxu0 0.0
  %805 = vmatpush1.msra.mxu0 0.0
  %806 = vmatprep.subr.mxu0 0.0
  %807 = vmatpush1.msra.mxu0 0.0
  %808 = vmatprep.subr.mxu0 0.0
  %809 = vmatpush1.msra.mxu0 0.0
  %810 = vmatprep.subr.mxu0 0.0
  %811 = vmatpush1.msra.mxu0 0.0
  %812 = vmatprep.subr.mxu0 0.0
  %813 = vmatpush1.msra.mxu0 0.0
  %814 = vmatprep.subr.mxu0 0.0
  %815 = vmatpush1.msra.mxu0 0.0
  %816 = vmatprep.subr.mxu0 0.0
  %817 = vmatpush1.msra.mxu0 0.0
  %818 = vmatprep.subr.mxu0 0.0
  %819 = vmatpush1.msra.mxu0 0.0
  %820 = vmatprep.subr.mxu0 0.0
  %821 = vmatpush1.msra.mxu0 0.0
  %822 = vmatprep.subr.mxu0 0.0
  %823 = vmatpush1.msra.mxu0 0.0
  %824 = vmatprep.subr.mxu0 0.0
  %825 = vmatpush1.msra.mxu0 0.0
  %826 = vmatprep.mubr.f32.mxu0 0.0
  %827 = vmatmul.mubr.f32.gmra.mrb[0].mxu0 %v667
  %v828 = vpop.f32.mrb[0].mxu0
  %v829 = vadd.f32 0.0, %v828
  %v830 = vpop.f32.mrb[0].mxu0
  %831 = vmatprep.mubr.f32.mxu0 0.0
  %832 = vmatmul.mubr.f32.gmra.mrb[0].mxu0 %v670
  %v833 = vpop.f32.mrb[0].mxu0
  %v834 = vadd.f32 0.0, %v833
  %v835 = vpop.f32.mrb[0].mxu0
  %836 = vmatprep.mubr.f32.mxu0 0.0
  %837 = vmatmul.mubr.f32.gmra.mrb[0].mxu0 %v673
  %v838 = vpop.f32.mrb[0].mxu0
  %v839 = vadd.f32 0.0, %v838
  %v840 = vpop.f32.mrb[0].mxu0
  %841 = vmatprep.mubr.f32.mxu0 0.0
  %842 = vmatmul.mubr.f32.gmra.mrb[0].mxu0 %v676
  %v843 = vpop.f32.mrb[0].mxu0
  %v844 = vadd.f32 0.0, %v843
  %v845 = vpop.f32.mrb[0].mxu0
  %846 = vmatprep.mubr.f32.mxu0 0.0
  %847 = vmatmul.mubr.f32.gmra.mrb[0].mxu0 %v679
  %v848 = vpop.f32.mrb[0].mxu0
  %v849 = vadd.f32 0.0, %v848
  %v850 = vpop.f32.mrb[0].mxu0
  %851 = vmatprep.mubr.f32.mxu0 0.0
  %852 = vmatmul.mubr.f32.gmra.mrb[0].mxu0 %v682
  %v853 = vpop.f32.mrb[0].mxu0
  %v854 = vadd.f32 0.0, %v853
  %v855 = vpop.f32.mrb[0].mxu0
  %856 = vmatprep.mubr.f32.mxu0 0.0
  %857 = vmatmul.mubr.f32.gmra.mrb[0].mxu0 %v685
  %v858 = vpop.f32.mrb[0].mxu0
  %v859 = vadd.f32 0.0, %v858
  %v860 = vpop.f32.mrb[0].mxu0
  %861 = vmatprep.mubr.f32.mxu0 0.0
  %862 = vmatmul.mubr.f32.gmra.mrb[0].mxu0 %v688
  %v863 = vpop.f32.mrb[0].mxu0
  %v864 = vadd.f32 0.0, %v863
  %v865 = vpop.f32.mrb[0].mxu0
  %866 = vmatprep.mubr.f32.mxu0 0.0
  %867 = vmatmul.mubr.f32.gmra.mrb[0].mxu0 %v691
  %v868 = vpop.f32.mrb[0].mxu0
  %v869 = vadd.f32 0.0, %v868
  %v870 = vpop.f32.mrb[0].mxu0
  %871 = vmatprep.mubr.f32.mxu0 0.0
  %872 = vmatmul.mubr.f32.gmra.mrb[0].mxu0 %v694
  %v873 = vpop.f32.mrb[0].mxu0
  %v874 = vadd.f32 0.0, %v873
  %v875 = vpop.f32.mrb[0].mxu0
  %876 = vmatprep.mubr.f32.mxu0 0.0
  %877 = vmatmul.mubr.f32.gmra.mrb[0].mxu0 %v697
  %v878 = vpop.f32.mrb[0].mxu0
  %v879 = vadd.f32 0.0, %v878
  %v880 = vpop.f32.mrb[0].mxu0
  %881 = vmatprep.mubr.f32.mxu0 0.0
  %882 = vmatmul.mubr.f32.gmra.mrb[0].mxu0 %v700
  %v883 = vpop.f32.mrb[0].mxu0
  %v884 = vadd.f32 0.0, %v883
  %v885 = vpop.f32.mrb[0].mxu0
  %886 = vmatprep.mubr.f32.mxu0 0.0
  %887 = vmatmul.mubr.f32.gmra.mrb[0].mxu0 %v703
  %v888 = vpop.f32.mrb[0].mxu0
  %v889 = vadd.f32 0.0, %v888
  %v890 = vpop.f32.mrb[0].mxu0
  %891 = vmatprep.mubr.f32.mxu0 0.0
  %892 = vmatmul.mubr.f32.gmra.mrb[0].mxu0 %v706
  %v893 = vpop.f32.mrb[0].mxu0
  %v894 = vadd.f32 0.0, %v893
  %v895 = vpop.f32.mrb[0].mxu0
  %896 = vmatprep.mubr.f32.mxu0 0.0
  %897 = vmatmul.mubr.f32.gmra.mrb[0].mxu0 %v709
  %v898 = vpop.f32.mrb[0].mxu0
  %v899 = vadd.f32 0.0, %v898
  %v900 = vpop.f32.mrb[0].mxu0
  %901 = vmatprep.mubr.f32.mxu0 0.0
  %902 = vmatmul.mubr.f32.gmra.mrb[0].mxu0 %v712
  %v903 = vpop.f32.mrb[0].mxu0
  %v904 = vadd.f32 0.0, %v903
  %v905 = vpop.f32.mrb[0].mxu0
  %906 = vmatprep.mubr.f32.mxu0 0.0
  %907 = vmatmul.mubr.f32.gmra.mrb[0].mxu0 %v715
  %v908 = vpop.f32.mrb[0].mxu0
  %v909 = vadd.f32 0.0, %v908
  %v910 = vpop.f32.mrb[0].mxu0
  %911 = vmatprep.mubr.f32.mxu0 0.0
  %912 = vmatmul.mubr.f32.gmra.mrb[0].mxu0 %v718
  %v913 = vpop.f32.mrb[0].mxu0
  %v914 = vadd.f32 0.0, %v913
  %v915 = vpop.f32.mrb[0].mxu0
  %916 = vmatprep.mubr.f32.mxu0 0.0
  %917 = vmatmul.mubr.f32.gmra.mrb[0].mxu0 %v721
  %v918 = vpop.f32.mrb[0].mxu0
  %v919 = vadd.f32 0.0, %v918
  %v920 = vpop.f32.mrb[0].mxu0
  %921 = vmatprep.mubr.f32.mxu0 0.0
  %922 = vmatmul.mubr.f32.gmra.mrb[0].mxu0 %v724
  %v923 = vpop.f32.mrb[0].mxu0
  %v924 = vadd.f32 0.0, %v923
  %v925 = vpop.f32.mrb[0].mxu0
  %926 = vmatprep.mubr.f32.mxu0 0.0
  %927 = vmatmul.mubr.f32.gmra.mrb[0].mxu0 %v727
  %v928 = vpop.f32.mrb[0].mxu0
  %v929 = vadd.f32 0.0, %v928
  %v930 = vpop.f32.mrb[0].mxu0
  %931 = vmatprep.mubr.f32.mxu0 0.0
  %932 = vmatmul.mubr.f32.gmra.mrb[0].mxu0 %v730
  %v933 = vpop.f32.mrb[0].mxu0
  %v934 = vadd.f32 0.0, %v933
  %v935 = vpop.f32.mrb[0].mxu0
  %936 = vmatprep.mubr.f32.mxu0 0.0
  %937 = vmatmul.mubr.f32.gmra.mrb[0].mxu0 %v733
  %v938 = vpop.f32.mrb[0].mxu0
  %v939 = vadd.f32 0.0, %v938
  %v940 = vpop.f32.mrb[0].mxu0
  %941 = vmatprep.mubr.f32.mxu0 0.0
  %942 = vmatmul.mubr.f32.gmra.mrb[0].mxu0 %v736
  %v943 = vpop.f32.mrb[0].mxu0
  %v944 = vadd.f32 0.0, %v943
  %v945 = vpop.f32.mrb[0].mxu0
  %946 = vmatprep.mubr.f32.mxu0 0.0
  %947 = vmatmul.mubr.f32.gmra.mrb[0].mxu0 %v739
  %v948 = vpop.f32.mrb[0].mxu0
  %v949 = vadd.f32 0.0, %v948
  %v950 = vpop.f32.mrb[0].mxu0
  %951 = vmatprep.mubr.f32.mxu0 0.0
  %952 = vmatmul.mubr.f32.gmra.mrb[0].mxu0 %v742
  %v953 = vpop.f32.mrb[0].mxu0
  %v954 = vadd.f32 0.0, %v953
  %v955 = vpop.f32.mrb[0].mxu0
  %956 = vmatprep.mubr.f32.mxu0 0.0
  %957 = vmatmul.mubr.f32.gmra.mrb[0].mxu0 %v745
  %v958 = vpop.f32.mrb[0].mxu0
  %v959 = vadd.f32 0.0, %v958
  %v960 = vpop.f32.mrb[0].mxu0
  %961 = vmatprep.mubr.f32.mxu0 0.0
  %962 = vmatmul.mubr.f32.gmra.mrb[0].mxu0 %v748
  %v963 = vpop.f32.mrb[0].mxu0
  %v964 = vadd.f32 0.0, %v963
  %v965 = vpop.f32.mrb[0].mxu0
  %966 = vmatprep.mubr.f32.mxu0 0.0
  %967 = vmatmul.mubr.f32.gmra.mrb[0].mxu0 %v751
  %v968 = vpop.f32.mrb[0].mxu0
  %v969 = vadd.f32 0.0, %v968
  %v970 = vpop.f32.mrb[0].mxu0
  %971 = vmatprep.mubr.f32.mxu0 0.0
  %972 = vmatmul.mubr.f32.gmra.mrb[0].mxu0 %v754
  %v973 = vpop.f32.mrb[0].mxu0
  %v974 = vadd.f32 0.0, %v973
  %v975 = vpop.f32.mrb[0].mxu0
  %976 = vmatprep.mubr.f32.mxu0 0.0
  %977 = vmatmul.mubr.f32.gmra.mrb[0].mxu0 %v757
  %v978 = vpop.f32.mrb[0].mxu0
  %v979 = vadd.f32 0.0, %v978
  %v980 = vpop.f32.mrb[0].mxu0
  %981 = vmatprep.mubr.f32.mxu0 0.0
  %982 = vmatmul.mubr.f32.gmra.mrb[0].mxu0 %v760
  %v983 = vpop.f32.mrb[0].mxu0
  %v984 = vadd.f32 0.0, %v983
  %v985 = vpop.f32.mrb[0].mxu0
  %986 = vdwg.mxu0
  %v987 = vld [vmem:[%s3] sm:$0xff]
  %v988 = vld [vmem:[%s3 + $0x8] sm:$0xff]
  %v989 = vld [vmem:[%s3 + $0x10] sm:$0xff]
  %v990 = vld [vmem:[%s3 + $0x18] sm:$0xff]
  %v991 = vld [vmem:[%s3 + $0x20] sm:$0xff]
  %v992 = vld [vmem:[%s3 + $0x28] sm:$0xff]
  %v993 = vld [vmem:[%s3 + $0x30] sm:$0xff]
  %v994 = vld [vmem:[%s3 + $0x38] sm:$0xff]
  %vm1027 = vcmask 1041409
  %v1028 = vsel %vm1027, %v447, %v440
  %vm1029 = vcmask 1042434
  %v1030 = vsel %vm1029, %v454, %v1028
  %vm1031 = vcmask 1043459
  %v1032 = vsel %vm1031, %v461, %v1030
  %vm1033 = vcmask 1044484
  %v1034 = vsel %vm1033, %v468, %v1032
  %vm1035 = vcmask 1045509
  %v1036 = vsel %vm1035, %v475, %v1034
  %vm1037 = vcmask 1046534
  %v1038 = vsel %vm1037, %v482, %v1036
  %vm1039 = vcmask 1047559
  %v1040 = vsel %vm1039, %v489, %v1038
  %v1041 = vsel %vm1027, %v503, %v496
  %v1042 = vsel %vm1029, %v510, %v1041
  %v1043 = vsel %vm1031, %v517, %v1042
  %v1044 = vsel %vm1033, %v524, %v1043
  %v1045 = vsel %vm1035, %v531, %v1044
  %v1046 = vsel %vm1037, %v538, %v1045
  %v1047 = vsel %vm1039, %v545, %v1046
  %v1048 = vsel %vm1027, %v559, %v552
  %v1049 = vsel %vm1029, %v566, %v1048
  %v1050 = vsel %vm1031, %v573, %v1049
  %v1051 = vsel %vm1033, %v580, %v1050
  %v1052 = vsel %vm1035, %v587, %v1051
  %v1053 = vsel %vm1037, %v594, %v1052
  %v1054 = vsel %vm1039, %v601, %v1053
  %v1055 = vsel %vm1027, %v615, %v608
  %v1056 = vsel %vm1029, %v622, %v1055
  %v1057 = vsel %vm1031, %v629, %v1056
  %v1058 = vsel %vm1033, %v636, %v1057
  %v1059 = vsel %vm1035, %v643, %v1058
  %v1060 = vsel %vm1037, %v650, %v1059
  %v1061 = vsel %vm1039, %v657, %v1060
  %v1062 = vsel %vm433, %v1040, 0
  %v1064 = vsel %vm433, %v1047, 0
  %v1066 = vsel %vm433, %v1054, 0
  %v1068 = vsel %vm433, %v1061, 0
  %1070 = vmatprep.subr.mxu0 0.0
  %1071 = vmatpush1.msra.mxu0 %v987
  %1072 = vmatprep.subr.mxu0 0.0
  %1073 = vmatpush1.msra.mxu0 %v988
  %1074 = vmatprep.subr.mxu0 0.0
  %1075 = vmatpush1.msra.mxu0 %v989
  %1076 = vmatprep.subr.mxu0 0.0
  %1077 = vmatpush1.msra.mxu0 %v990
  %1078 = vmatprep.subr.mxu0 0.0
  %1079 = vmatpush1.msra.mxu0 %v991
  %1080 = vmatprep.subr.mxu0 0.0
  %1081 = vmatpush1.msra.mxu0 %v992
  %1082 = vmatprep.subr.mxu0 0.0
  %1083 = vmatpush1.msra.mxu0 %v993
  %1084 = vmatprep.subr.mxu0 0.0
  %1085 = vmatpush1.msra.mxu0 %v994
  %1086 = vmatprep.subr.mxu0 0.0
  %1087 = vmatpush1.msra.mxu0 0.0
  %1088 = vmatprep.subr.mxu0 0.0
  %1089 = vmatpush1.msra.mxu0 0.0
  %1090 = vmatprep.subr.mxu0 0.0
  %1091 = vmatpush1.msra.mxu0 0.0
  %1092 = vmatprep.subr.mxu0 0.0
  %1093 = vmatpush1.msra.mxu0 0.0
  %1094 = vmatprep.subr.mxu0 0.0
  %1095 = vmatpush1.msra.mxu0 0.0
  %1096 = vmatprep.subr.mxu0 0.0
  %1097 = vmatpush1.msra.mxu0 0.0
  %1098 = vmatprep.subr.mxu0 0.0
  %1099 = vmatpush1.msra.mxu0 0.0
  %1100 = vmatprep.subr.mxu0 0.0
  %1101 = vmatpush1.msra.mxu0 0.0
  %1102 = vmatprep.subr.mxu0 0.0
  %1103 = vmatpush1.msra.mxu0 0.0
  %1104 = vmatprep.subr.mxu0 0.0
  %1105 = vmatpush1.msra.mxu0 0.0
  %1106 = vmatprep.subr.mxu0 0.0
  %1107 = vmatpush1.msra.mxu0 0.0
  %1108 = vmatprep.subr.mxu0 0.0
  %1109 = vmatpush1.msra.mxu0 0.0
  %1110 = vmatprep.subr.mxu0 0.0
  %1111 = vmatpush1.msra.mxu0 0.0
  %1112 = vmatprep.subr.mxu0 0.0
  %1113 = vmatpush1.msra.mxu0 0.0
  %1114 = vmatprep.subr.mxu0 0.0
  %1115 = vmatpush1.msra.mxu0 0.0
  %1116 = vmatprep.subr.mxu0 0.0
  %1117 = vmatpush1.msra.mxu0 0.0
  %1118 = vmatprep.subr.mxu0 0.0
  %1119 = vmatpush1.msra.mxu0 0.0
  %1120 = vmatprep.subr.mxu0 0.0
  %1121 = vmatpush1.msra.mxu0 0.0
  %1122 = vmatprep.subr.mxu0 0.0
  %1123 = vmatpush1.msra.mxu0 0.0
  %1124 = vmatprep.subr.mxu0 0.0
  %1125 = vmatpush1.msra.mxu0 0.0
  %1126 = vmatprep.subr.mxu0 0.0
  %1127 = vmatpush1.msra.mxu0 0.0
  %1128 = vmatprep.subr.mxu0 0.0
  %1129 = vmatpush1.msra.mxu0 0.0
  %1130 = vmatprep.subr.mxu0 0.0
  %1131 = vmatpush1.msra.mxu0 0.0
  %1132 = vmatprep.subr.mxu0 0.0
  %1133 = vmatpush1.msra.mxu0 0.0
  %1134 = vmatprep.mubr.f32.mxu0 0.0
  %1135 = vmatmul.mubr.f32.gmra.mrb[0].mxu0 %v1062
  %v1136 = vpop.f32.mrb[0].mxu0
  %v1137 = vadd.f32 0.0, %v1136
  %v1138 = vpop.f32.mrb[0].mxu0
  %1139 = vmatprep.mubr.f32.mxu0 0.0
  %1140 = vmatmul.mubr.f32.gmra.mrb[0].mxu0 %v1064
  %v1141 = vpop.f32.mrb[0].mxu0
  %v1142 = vadd.f32 0.0, %v1141
  %v1143 = vpop.f32.mrb[0].mxu0
  %1144 = vmatprep.mubr.f32.mxu0 0.0
  %1145 = vmatmul.mubr.f32.gmra.mrb[0].mxu0 %v1066
  %v1146 = vpop.f32.mrb[0].mxu0
  %v1147 = vadd.f32 0.0, %v1146
  %v1148 = vpop.f32.mrb[0].mxu0
  %1149 = vmatprep.mubr.f32.mxu0 0.0
  %1150 = vmatmul.mubr.f32.gmra.mrb[0].mxu0 %v1068
  %v1151 = vpop.f32.mrb[0].mxu0
  %v1152 = vadd.f32 0.0, %v1151
  %v1153 = vpop.f32.mrb[0].mxu0
  %1154 = vdwg.mxu0
  %v1159 = vcombine.high %v1137, %v1137
  %v1161 = vunpack.c.l.s4 1966171168
  %v1162 = vunpack.c.0.s8 %v1161
  %v1163 = vlaneseq
  %v1164 = vshrl.u32 %v1163, 7
  %v1165 = vsub.s32 %v1162, %v1164
  %v1166 = vrot.slane %v1137, %v1165
  %v1168 = vunpack.c.l.s4 1966171168
  %v1169 = vunpack.c.0.s8 %v1168
  %v1170 = vlaneseq
  %v1171 = vshrl.u32 %v1170, 7
  %v1172 = vsub.s32 %v1169, %v1171
  %v1173 = vrot.slane %v1159, %v1172
  %v1174 = vcombine.high %v1166, %v1166
  %v1175 = vcombine.high %v1173, %v1173
  %v1177 = vunpack.c.l.s4 1966171168
  %v1178 = vunpack.c.0.s8 %v1177
  %v1179 = vlaneseq
  %v1180 = vshrl.u32 %v1179, 7
  %v1181 = vsub.s32 %v1178, %v1180
  %v1182 = vrot.slane %v1166, %v1181
  %v1184 = vunpack.c.l.s4 1966171168
  %v1185 = vunpack.c.0.s8 %v1184
  %v1186 = vlaneseq
  %v1187 = vshrl.u32 %v1186, 7
  %v1188 = vsub.s32 %v1185, %v1187
  %v1189 = vrot.slane %v1173, %v1188
  %v1191 = vunpack.c.l.s4 1966171168
  %v1192 = vunpack.c.0.s8 %v1191
  %v1193 = vlaneseq
  %v1194 = vshrl.u32 %v1193, 7
  %v1195 = vsub.s32 %v1192, %v1194
  %v1196 = vrot.slane %v1174, %v1195
  %v1198 = vunpack.c.l.s4 1966171168
  %v1199 = vunpack.c.0.s8 %v1198
  %v1200 = vlaneseq
  %v1201 = vshrl.u32 %v1200, 7
  %v1202 = vsub.s32 %v1199, %v1201
  %v1203 = vrot.slane %v1175, %v1202
  %v1204 = vcombine.high %v1182, %v1182
  %v1205 = vcombine.high %v1189, %v1189
  %v1206 = vcombine.high %v1196, %v1196
  %v1207 = vcombine.high %v1203, %v1203
  %v1208 = vcombine.high %v1142, %v1142
  %v1210 = vunpack.c.l.s4 1966171168
  %v1211 = vunpack.c.0.s8 %v1210
  %v1212 = vlaneseq
  %v1213 = vshrl.u32 %v1212, 7
  %v1214 = vsub.s32 %v1211, %v1213
  %v1215 = vrot.slane %v1142, %v1214
  %v1217 = vunpack.c.l.s4 1966171168
  %v1218 = vunpack.c.0.s8 %v1217
  %v1219 = vlaneseq
  %v1220 = vshrl.u32 %v1219, 7
  %v1221 = vsub.s32 %v1218, %v1220
  %v1222 = vrot.slane %v1208, %v1221
  %v1223 = vcombine.high %v1215, %v1215
  %v1224 = vcombine.high %v1222, %v1222
  %v1226 = vunpack.c.l.s4 1966171168
  %v1227 = vunpack.c.0.s8 %v1226
  %v1228 = vlaneseq
  %v1229 = vshrl.u32 %v1228, 7
  %v1230 = vsub.s32 %v1227, %v1229
  %v1231 = vrot.slane %v1215, %v1230
  %v1233 = vunpack.c.l.s4 1966171168
  %v1234 = vunpack.c.0.s8 %v1233
  %v1235 = vlaneseq
  %v1236 = vshrl.u32 %v1235, 7
  %v1237 = vsub.s32 %v1234, %v1236
  %v1238 = vrot.slane %v1222, %v1237
  %v1240 = vunpack.c.l.s4 1966171168
  %v1241 = vunpack.c.0.s8 %v1240
  %v1242 = vlaneseq
  %v1243 = vshrl.u32 %v1242, 7
  %v1244 = vsub.s32 %v1241, %v1243
  %v1245 = vrot.slane %v1223, %v1244
  %v1247 = vunpack.c.l.s4 1966171168
  %v1248 = vunpack.c.0.s8 %v1247
  %v1249 = vlaneseq
  %v1250 = vshrl.u32 %v1249, 7
  %v1251 = vsub.s32 %v1248, %v1250
  %v1252 = vrot.slane %v1224, %v1251
  %v1253 = vcombine.high %v1231, %v1231
  %v1254 = vcombine.high %v1238, %v1238
  %v1255 = vcombine.high %v1245, %v1245
  %v1256 = vcombine.high %v1252, %v1252
  %v1257 = vcombine.high %v1147, %v1147
  %v1259 = vunpack.c.l.s4 1966171168
  %v1260 = vunpack.c.0.s8 %v1259
  %v1261 = vlaneseq
  %v1262 = vshrl.u32 %v1261, 7
  %v1263 = vsub.s32 %v1260, %v1262
  %v1264 = vrot.slane %v1147, %v1263
  %v1266 = vunpack.c.l.s4 1966171168
  %v1267 = vunpack.c.0.s8 %v1266
  %v1268 = vlaneseq
  %v1269 = vshrl.u32 %v1268, 7
  %v1270 = vsub.s32 %v1267, %v1269
  %v1271 = vrot.slane %v1257, %v1270
  %v1272 = vcombine.high %v1264, %v1264
  %v1273 = vcombine.high %v1271, %v1271
  %v1275 = vunpack.c.l.s4 1966171168
  %v1276 = vunpack.c.0.s8 %v1275
  %v1277 = vlaneseq
  %v1278 = vshrl.u32 %v1277, 7
  %v1279 = vsub.s32 %v1276, %v1278
  %v1280 = vrot.slane %v1264, %v1279
  %v1282 = vunpack.c.l.s4 1966171168
  %v1283 = vunpack.c.0.s8 %v1282
  %v1284 = vlaneseq
  %v1285 = vshrl.u32 %v1284, 7
  %v1286 = vsub.s32 %v1283, %v1285
  %v1287 = vrot.slane %v1271, %v1286
  %v1289 = vunpack.c.l.s4 1966171168
  %v1290 = vunpack.c.0.s8 %v1289
  %v1291 = vlaneseq
  %v1292 = vshrl.u32 %v1291, 7
  %v1293 = vsub.s32 %v1290, %v1292
  %v1294 = vrot.slane %v1272, %v1293
  %v1296 = vunpack.c.l.s4 1966171168
  %v1297 = vunpack.c.0.s8 %v1296
  %v1298 = vlaneseq
  %v1299 = vshrl.u32 %v1298, 7
  %v1300 = vsub.s32 %v1297, %v1299
  %v1301 = vrot.slane %v1273, %v1300
  %v1302 = vcombine.high %v1280, %v1280
  %v1303 = vcombine.high %v1287, %v1287
  %v1304 = vcombine.high %v1294, %v1294
  %v1305 = vcombine.high %v1301, %v1301
  %v1306 = vcombine.high %v1152, %v1152
  %v1308 = vunpack.c.l.s4 1966171168
  %v1309 = vunpack.c.0.s8 %v1308
  %v1310 = vlaneseq
  %v1311 = vshrl.u32 %v1310, 7
  %v1312 = vsub.s32 %v1309, %v1311
  %v1313 = vrot.slane %v1152, %v1312
  %v1315 = vunpack.c.l.s4 1966171168
  %v1316 = vunpack.c.0.s8 %v1315
  %v1317 = vlaneseq
  %v1318 = vshrl.u32 %v1317, 7
  %v1319 = vsub.s32 %v1316, %v1318
  %v1320 = vrot.slane %v1306, %v1319
  %v1321 = vcombine.high %v1313, %v1313
  %v1322 = vcombine.high %v1320, %v1320
  %v1324 = vunpack.c.l.s4 1966171168
  %v1325 = vunpack.c.0.s8 %v1324
  %v1326 = vlaneseq
  %v1327 = vshrl.u32 %v1326, 7
  %v1328 = vsub.s32 %v1325, %v1327
  %v1329 = vrot.slane %v1313, %v1328
  %v1331 = vunpack.c.l.s4 1966171168
  %v1332 = vunpack.c.0.s8 %v1331
  %v1333 = vlaneseq
  %v1334 = vshrl.u32 %v1333, 7
  %v1335 = vsub.s32 %v1332, %v1334
  %v1336 = vrot.slane %v1320, %v1335
  %v1338 = vunpack.c.l.s4 1966171168
  %v1339 = vunpack.c.0.s8 %v1338
  %v1340 = vlaneseq
  %v1341 = vshrl.u32 %v1340, 7
  %v1342 = vsub.s32 %v1339, %v1341
  %v1343 = vrot.slane %v1321, %v1342
  %v1345 = vunpack.c.l.s4 1966171168
  %v1346 = vunpack.c.0.s8 %v1345
  %v1347 = vlaneseq
  %v1348 = vshrl.u32 %v1347, 7
  %v1349 = vsub.s32 %v1346, %v1348
  %v1350 = vrot.slane %v1322, %v1349
  %v1351 = vcombine.high %v1329, %v1329
  %v1352 = vcombine.high %v1336, %v1336
  %v1353 = vcombine.high %v1343, %v1343
  %v1354 = vcombine.high %v1350, %v1350
  %v1355 = vlaneseq
  %v1356 = vshrl.u32 %v1355, 7
  %v1357 = vsub.s32 0, %v1356
  %v1358 = vrot.slane %v1182, %v1357
  %v1359 = vlaneseq
  %v1360 = vshrl.u32 %v1359, 7
  %v1361 = vsub.s32 0, %v1360
  %v1362 = vrot.slane %v1196, %v1361
  %v1363 = vlaneseq
  %v1364 = vshrl.u32 %v1363, 7
  %v1365 = vsub.s32 0, %v1364
  %v1366 = vrot.slane %v1204, %v1365
  %v1367 = vlaneseq
  %v1368 = vshrl.u32 %v1367, 7
  %v1369 = vsub.s32 0, %v1368
  %v1370 = vrot.slane %v1206, %v1369
  %v1371 = vlaneseq
  %v1372 = vshrl.u32 %v1371, 7
  %v1373 = vsub.s32 0, %v1372
  %v1374 = vrot.slane %v1189, %v1373
  %v1375 = vlaneseq
  %v1376 = vshrl.u32 %v1375, 7
  %v1377 = vsub.s32 0, %v1376
  %v1378 = vrot.slane %v1203, %v1377
  %v1379 = vlaneseq
  %v1380 = vshrl.u32 %v1379, 7
  %v1381 = vsub.s32 0, %v1380
  %v1382 = vrot.slane %v1205, %v1381
  %v1383 = vlaneseq
  %v1384 = vshrl.u32 %v1383, 7
  %v1385 = vsub.s32 0, %v1384
  %v1386 = vrot.slane %v1207, %v1385
  %v1387 = vlaneseq
  %v1388 = vshrl.u32 %v1387, 7
  %v1389 = vsub.s32 0, %v1388
  %v1390 = vrot.slane %v1231, %v1389
  %v1391 = vlaneseq
  %v1392 = vshrl.u32 %v1391, 7
  %v1393 = vsub.s32 0, %v1392
  %v1394 = vrot.slane %v1245, %v1393
  %v1395 = vlaneseq
  %v1396 = vshrl.u32 %v1395, 7
  %v1397 = vsub.s32 0, %v1396
  %v1398 = vrot.slane %v1253, %v1397
  %v1399 = vlaneseq
  %v1400 = vshrl.u32 %v1399, 7
  %v1401 = vsub.s32 0, %v1400
  %v1402 = vrot.slane %v1255, %v1401
  %v1403 = vlaneseq
  %v1404 = vshrl.u32 %v1403, 7
  %v1405 = vsub.s32 0, %v1404
  %v1406 = vrot.slane %v1238, %v1405
  %v1407 = vlaneseq
  %v1408 = vshrl.u32 %v1407, 7
  %v1409 = vsub.s32 0, %v1408
  %v1410 = vrot.slane %v1252, %v1409
  %v1411 = vlaneseq
  %v1412 = vshrl.u32 %v1411, 7
  %v1413 = vsub.s32 0, %v1412
  %v1414 = vrot.slane %v1254, %v1413
  %v1415 = vlaneseq
  %v1416 = vshrl.u32 %v1415, 7
  %v1417 = vsub.s32 0, %v1416
  %v1418 = vrot.slane %v1256, %v1417
  %v1419 = vlaneseq
  %v1420 = vshrl.u32 %v1419, 7
  %v1421 = vsub.s32 0, %v1420
  %v1422 = vrot.slane %v1280, %v1421
  %v1423 = vlaneseq
  %v1424 = vshrl.u32 %v1423, 7
  %v1425 = vsub.s32 0, %v1424
  %v1426 = vrot.slane %v1294, %v1425
  %v1427 = vlaneseq
  %v1428 = vshrl.u32 %v1427, 7
  %v1429 = vsub.s32 0, %v1428
  %v1430 = vrot.slane %v1302, %v1429
  %v1431 = vlaneseq
  %v1432 = vshrl.u32 %v1431, 7
  %v1433 = vsub.s32 0, %v1432
  %v1434 = vrot.slane %v1304, %v1433
  %v1435 = vlaneseq
  %v1436 = vshrl.u32 %v1435, 7
  %v1437 = vsub.s32 0, %v1436
  %v1438 = vrot.slane %v1287, %v1437
  %v1439 = vlaneseq
  %v1440 = vshrl.u32 %v1439, 7
  %v1441 = vsub.s32 0, %v1440
  %v1442 = vrot.slane %v1301, %v1441
  %v1443 = vlaneseq
  %v1444 = vshrl.u32 %v1443, 7
  %v1445 = vsub.s32 0, %v1444
  %v1446 = vrot.slane %v1303, %v1445
  %v1447 = vlaneseq
  %v1448 = vshrl.u32 %v1447, 7
  %v1449 = vsub.s32 0, %v1448
  %v1450 = vrot.slane %v1305, %v1449
  %v1451 = vlaneseq
  %v1452 = vshrl.u32 %v1451, 7
  %v1453 = vsub.s32 0, %v1452
  %v1454 = vrot.slane %v1329, %v1453
  %v1455 = vlaneseq
  %v1456 = vshrl.u32 %v1455, 7
  %v1457 = vsub.s32 0, %v1456
  %v1458 = vrot.slane %v1343, %v1457
  %v1459 = vlaneseq
  %v1460 = vshrl.u32 %v1459, 7
  %v1461 = vsub.s32 0, %v1460
  %v1462 = vrot.slane %v1351, %v1461
  %v1463 = vlaneseq
  %v1464 = vshrl.u32 %v1463, 7
  %v1465 = vsub.s32 0, %v1464
  %v1466 = vrot.slane %v1353, %v1465
  %v1467 = vlaneseq
  %v1468 = vshrl.u32 %v1467, 7
  %v1469 = vsub.s32 0, %v1468
  %v1470 = vrot.slane %v1336, %v1469
  %v1471 = vlaneseq
  %v1472 = vshrl.u32 %v1471, 7
  %v1473 = vsub.s32 0, %v1472
  %v1474 = vrot.slane %v1350, %v1473
  %v1475 = vlaneseq
  %v1476 = vshrl.u32 %v1475, 7
  %v1477 = vsub.s32 0, %v1476
  %v1478 = vrot.slane %v1352, %v1477
  %v1479 = vlaneseq
  %v1480 = vshrl.u32 %v1479, 7
  %v1481 = vsub.s32 0, %v1480
  %v1482 = vrot.slane %v1354, %v1481
  %v1515 = vadd.f32 %v829, %v1358
  %v1516 = vadd.f32 %v834, %v1362
  %v1517 = vadd.f32 %v839, %v1366
  %v1518 = vadd.f32 %v844, %v1370
  %v1519 = vadd.f32 %v849, %v1374
  %v1520 = vadd.f32 %v854, %v1378
  %v1521 = vadd.f32 %v859, %v1382
  %v1522 = vadd.f32 %v864, %v1386
  %v1523 = vadd.f32 %v869, %v1390
  %v1524 = vadd.f32 %v874, %v1394
  %v1525 = vadd.f32 %v879, %v1398
  %v1526 = vadd.f32 %v884, %v1402
  %v1527 = vadd.f32 %v889, %v1406
  %v1528 = vadd.f32 %v894, %v1410
  %v1529 = vadd.f32 %v899, %v1414
  %v1530 = vadd.f32 %v904, %v1418
  %v1531 = vadd.f32 %v909, %v1422
  %v1532 = vadd.f32 %v914, %v1426
  %v1533 = vadd.f32 %v919, %v1430
  %v1534 = vadd.f32 %v924, %v1434
  %v1535 = vadd.f32 %v929, %v1438
  %v1536 = vadd.f32 %v934, %v1442
  %v1537 = vadd.f32 %v939, %v1446
  %v1538 = vadd.f32 %v944, %v1450
  %v1539 = vadd.f32 %v949, %v1454
  %v1540 = vadd.f32 %v954, %v1458
  %v1541 = vadd.f32 %v959, %v1462
  %v1542 = vadd.f32 %v964, %v1466
  %v1543 = vadd.f32 %v969, %v1470
  %v1544 = vadd.f32 %v974, %v1474
  %v1545 = vadd.f32 %v979, %v1478
  %v1546 = vadd.f32 %v984, %v1482
  %v1547 = vld [vmem:[%s5] sm:$0x1]
  %v1549 = vlaneseq
  %v1550 = vshrl.u32 %v1549, 7
  %v1551 = vsub.s32 0, %v1550
  %v1552 = vrot.slane %v1547, %v1551
  %v1554 = vadd.f32 %v1515, %v1552
  %v1555 = vadd.f32 %v1516, %v1552
  %v1556 = vadd.f32 %v1517, %v1552
  %v1557 = vadd.f32 %v1518, %v1552
  %v1558 = vadd.f32 %v1519, %v1552
  %v1559 = vadd.f32 %v1520, %v1552
  %v1560 = vadd.f32 %v1521, %v1552
  %v1561 = vadd.f32 %v1522, %v1552
  %v1562 = vadd.f32 %v1523, %v1552
  %v1563 = vadd.f32 %v1524, %v1552
  %v1564 = vadd.f32 %v1525, %v1552
  %v1565 = vadd.f32 %v1526, %v1552
  %v1566 = vadd.f32 %v1527, %v1552
  %v1567 = vadd.f32 %v1528, %v1552
  %v1568 = vadd.f32 %v1529, %v1552
  %v1569 = vadd.f32 %v1530, %v1552
  %v1570 = vadd.f32 %v1531, %v1552
  %v1571 = vadd.f32 %v1532, %v1552
  %v1572 = vadd.f32 %v1533, %v1552
  %v1573 = vadd.f32 %v1534, %v1552
  %v1574 = vadd.f32 %v1535, %v1552
  %v1575 = vadd.f32 %v1536, %v1552
  %v1576 = vadd.f32 %v1537, %v1552
  %v1577 = vadd.f32 %v1538, %v1552
  %v1578 = vadd.f32 %v1539, %v1552
  %v1579 = vadd.f32 %v1540, %v1552
  %v1580 = vadd.f32 %v1541, %v1552
  %v1581 = vadd.f32 %v1542, %v1552
  %v1582 = vadd.f32 %v1543, %v1552
  %v1583 = vadd.f32 %v1544, %v1552
  %v1584 = vadd.f32 %v1545, %v1552
  %v1585 = vadd.f32 %v1546, %v1552
  %v1586 = vmax.f32 %v1554, 0.0
  %v1587 = vmax.f32 %v1555, 0.0
  %v1588 = vmax.f32 %v1556, 0.0
  %v1589 = vmax.f32 %v1557, 0.0
  %v1590 = vmax.f32 %v1558, 0.0
  %v1591 = vmax.f32 %v1559, 0.0
  %v1592 = vmax.f32 %v1560, 0.0
  %v1593 = vmax.f32 %v1561, 0.0
  %v1594 = vmax.f32 %v1562, 0.0
  %v1595 = vmax.f32 %v1563, 0.0
  %v1596 = vmax.f32 %v1564, 0.0
  %v1597 = vmax.f32 %v1565, 0.0
  %v1598 = vmax.f32 %v1566, 0.0
  %v1599 = vmax.f32 %v1567, 0.0
  %v1600 = vmax.f32 %v1568, 0.0
  %v1601 = vmax.f32 %v1569, 0.0
  %v1602 = vmax.f32 %v1570, 0.0
  %v1603 = vmax.f32 %v1571, 0.0
  %v1604 = vmax.f32 %v1572, 0.0
  %v1605 = vmax.f32 %v1573, 0.0
  %v1606 = vmax.f32 %v1574, 0.0
  %v1607 = vmax.f32 %v1575, 0.0
  %v1608 = vmax.f32 %v1576, 0.0
  %v1609 = vmax.f32 %v1577, 0.0
  %v1610 = vmax.f32 %v1578, 0.0
  %v1611 = vmax.f32 %v1579, 0.0
  %v1612 = vmax.f32 %v1580, 0.0
  %v1613 = vmax.f32 %v1581, 0.0
  %v1614 = vmax.f32 %v1582, 0.0
  %v1615 = vmax.f32 %v1583, 0.0
  %v1616 = vmax.f32 %v1584, 0.0
  %v1617 = vmax.f32 %v1585, 0.0
  %v1618 = vld [vmem:[%s6] sm:$0xff]
  %v1619 = vld [vmem:[%s6 + $0x8] sm:$0xff]
  %v1620 = vld [vmem:[%s6 + $0x10] sm:$0xff]
  %v1621 = vld [vmem:[%s6 + $0x18] sm:$0xff]
  %v1622 = vld [vmem:[%s6 + $0x20] sm:$0xff]
  %v1623 = vld [vmem:[%s6 + $0x28] sm:$0xff]
  %v1624 = vld [vmem:[%s6 + $0x30] sm:$0xff]
  %v1625 = vld [vmem:[%s6 + $0x38] sm:$0xff]
  %v1626 = vld [vmem:[%s6 + $0x40] sm:$0xff]
  %v1627 = vld [vmem:[%s6 + $0x48] sm:$0xff]
  %v1628 = vld [vmem:[%s6 + $0x50] sm:$0xff]
  %v1629 = vld [vmem:[%s6 + $0x58] sm:$0xff]
  %v1630 = vld [vmem:[%s6 + $0x60] sm:$0xff]
  %v1631 = vld [vmem:[%s6 + $0x68] sm:$0xff]
  %v1632 = vld [vmem:[%s6 + $0x70] sm:$0xff]
  %v1633 = vld [vmem:[%s6 + $0x78] sm:$0xff]
  %v1634 = vld [vmem:[%s7] sm:$0x1]
  %v1636 = vlaneseq
  %v1637 = vshrl.u32 %v1636, 7
  %v1638 = vsub.s32 0, %v1637
  %v1639 = vrot.slane %v1634, %v1638
  %1641 = vmatprep.subr.mxu0 0.0
  %1642 = vmatpush1.msra.mxu0 %v1618
  %1643 = vmatprep.subr.mxu0 0.0
  %1644 = vmatpush1.msra.mxu0 %v1619
  %1645 = vmatprep.subr.mxu0 0.0
  %1646 = vmatpush1.msra.mxu0 %v1620
  %1647 = vmatprep.subr.mxu0 0.0
  %1648 = vmatpush1.msra.mxu0 %v1621
  %1649 = vmatprep.subr.mxu0 0.0
  %1650 = vmatpush1.msra.mxu0 %v1622
  %1651 = vmatprep.subr.mxu0 0.0
  %1652 = vmatpush1.msra.mxu0 %v1623
  %1653 = vmatprep.subr.mxu0 0.0
  %1654 = vmatpush1.msra.mxu0 %v1624
  %1655 = vmatprep.subr.mxu0 0.0
  %1656 = vmatpush1.msra.mxu0 %v1625
  %1657 = vmatprep.subr.mxu0 0.0
  %1658 = vmatpush1.msra.mxu0 %v1626
  %1659 = vmatprep.subr.mxu0 0.0
  %1660 = vmatpush1.msra.mxu0 %v1627
  %1661 = vmatprep.subr.mxu0 0.0
  %1662 = vmatpush1.msra.mxu0 %v1628
  %1663 = vmatprep.subr.mxu0 0.0
  %1664 = vmatpush1.msra.mxu0 %v1629
  %1665 = vmatprep.subr.mxu0 0.0
  %1666 = vmatpush1.msra.mxu0 %v1630
  %1667 = vmatprep.subr.mxu0 0.0
  %1668 = vmatpush1.msra.mxu0 %v1631
  %1669 = vmatprep.subr.mxu0 0.0
  %1670 = vmatpush1.msra.mxu0 %v1632
  %1671 = vmatprep.subr.mxu0 0.0
  %1672 = vmatpush1.msra.mxu0 %v1633
  %1673 = vmatprep.subr.mxu0 0.0
  %1674 = vmatpush1.msra.mxu0 0.0
  %1675 = vmatprep.subr.mxu0 0.0
  %1676 = vmatpush1.msra.mxu0 0.0
  %1677 = vmatprep.subr.mxu0 0.0
  %1678 = vmatpush1.msra.mxu0 0.0
  %1679 = vmatprep.subr.mxu0 0.0
  %1680 = vmatpush1.msra.mxu0 0.0
  %1681 = vmatprep.subr.mxu0 0.0
  %1682 = vmatpush1.msra.mxu0 0.0
  %1683 = vmatprep.subr.mxu0 0.0
  %1684 = vmatpush1.msra.mxu0 0.0
  %1685 = vmatprep.subr.mxu0 0.0
  %1686 = vmatpush1.msra.mxu0 0.0
  %1687 = vmatprep.subr.mxu0 0.0
  %1688 = vmatpush1.msra.mxu0 0.0
  %1689 = vmatprep.subr.mxu0 0.0
  %1690 = vmatpush1.msra.mxu0 0.0
  %1691 = vmatprep.subr.mxu0 0.0
  %1692 = vmatpush1.msra.mxu0 0.0
  %1693 = vmatprep.subr.mxu0 0.0
  %1694 = vmatpush1.msra.mxu0 0.0
  %1695 = vmatprep.subr.mxu0 0.0
  %1696 = vmatpush1.msra.mxu0 0.0
  %1697 = vmatprep.subr.mxu0 0.0
  %1698 = vmatpush1.msra.mxu0 0.0
  %1699 = vmatprep.subr.mxu0 0.0
  %1700 = vmatpush1.msra.mxu0 0.0
  %1701 = vmatprep.subr.mxu0 0.0
  %1702 = vmatpush1.msra.mxu0 0.0
  %1703 = vmatprep.subr.mxu0 0.0
  %1704 = vmatpush1.msra.mxu0 0.0
  %1705 = vmatprep.mubr.f32.mxu0 0.0
  %1706 = vmatmul.mubr.f32.gmra.mrb[0].mxu0 %v1586
  %v1707 = vpop.f32.mrb[0].mxu0
  %v1708 = vadd.f32 %v1639, %v1707
  %v1709 = vpop.f32.mrb[0].mxu0
  %1710 = vmatprep.mubr.f32.mxu0 0.0
  %1711 = vmatmul.mubr.f32.gmra.mrb[0].mxu0 %v1587
  %v1712 = vpop.f32.mrb[0].mxu0
  %v1713 = vadd.f32 %v1639, %v1712
  %v1714 = vpop.f32.mrb[0].mxu0
  %1715 = vmatprep.mubr.f32.mxu0 0.0
  %1716 = vmatmul.mubr.f32.gmra.mrb[0].mxu0 %v1588
  %v1717 = vpop.f32.mrb[0].mxu0
  %v1718 = vadd.f32 %v1639, %v1717
  %v1719 = vpop.f32.mrb[0].mxu0
  %1720 = vmatprep.mubr.f32.mxu0 0.0
  %1721 = vmatmul.mubr.f32.gmra.mrb[0].mxu0 %v1589
  %v1722 = vpop.f32.mrb[0].mxu0
  %v1723 = vadd.f32 %v1639, %v1722
  %v1724 = vpop.f32.mrb[0].mxu0
  %1725 = vmatprep.mubr.f32.mxu0 0.0
  %1726 = vmatmul.mubr.f32.gmra.mrb[0].mxu0 %v1590
  %v1727 = vpop.f32.mrb[0].mxu0
  %v1728 = vadd.f32 %v1639, %v1727
  %v1729 = vpop.f32.mrb[0].mxu0
  %1730 = vmatprep.mubr.f32.mxu0 0.0
  %1731 = vmatmul.mubr.f32.gmra.mrb[0].mxu0 %v1591
  %v1732 = vpop.f32.mrb[0].mxu0
  %v1733 = vadd.f32 %v1639, %v1732
  %v1734 = vpop.f32.mrb[0].mxu0
  %1735 = vmatprep.mubr.f32.mxu0 0.0
  %1736 = vmatmul.mubr.f32.gmra.mrb[0].mxu0 %v1592
  %v1737 = vpop.f32.mrb[0].mxu0
  %v1738 = vadd.f32 %v1639, %v1737
  %v1739 = vpop.f32.mrb[0].mxu0
  %1740 = vmatprep.mubr.f32.mxu0 0.0
  %1741 = vmatmul.mubr.f32.gmra.mrb[0].mxu0 %v1593
  %v1742 = vpop.f32.mrb[0].mxu0
  %v1743 = vadd.f32 %v1639, %v1742
  %v1744 = vpop.f32.mrb[0].mxu0
  %1745 = vmatprep.mubr.f32.mxu0 0.0
  %1746 = vmatmul.mubr.f32.gmra.mrb[0].mxu0 %v1594
  %v1747 = vpop.f32.mrb[0].mxu0
  %v1748 = vadd.f32 %v1639, %v1747
  %v1749 = vpop.f32.mrb[0].mxu0
  %1750 = vmatprep.mubr.f32.mxu0 0.0
  %1751 = vmatmul.mubr.f32.gmra.mrb[0].mxu0 %v1595
  %v1752 = vpop.f32.mrb[0].mxu0
  %v1753 = vadd.f32 %v1639, %v1752
  %v1754 = vpop.f32.mrb[0].mxu0
  %1755 = vmatprep.mubr.f32.mxu0 0.0
  %1756 = vmatmul.mubr.f32.gmra.mrb[0].mxu0 %v1596
  %v1757 = vpop.f32.mrb[0].mxu0
  %v1758 = vadd.f32 %v1639, %v1757
  %v1759 = vpop.f32.mrb[0].mxu0
  %1760 = vmatprep.mubr.f32.mxu0 0.0
  %1761 = vmatmul.mubr.f32.gmra.mrb[0].mxu0 %v1597
  %v1762 = vpop.f32.mrb[0].mxu0
  %v1763 = vadd.f32 %v1639, %v1762
  %v1764 = vpop.f32.mrb[0].mxu0
  %1765 = vmatprep.mubr.f32.mxu0 0.0
  %1766 = vmatmul.mubr.f32.gmra.mrb[0].mxu0 %v1598
  %v1767 = vpop.f32.mrb[0].mxu0
  %v1768 = vadd.f32 %v1639, %v1767
  %v1769 = vpop.f32.mrb[0].mxu0
  %1770 = vmatprep.mubr.f32.mxu0 0.0
  %1771 = vmatmul.mubr.f32.gmra.mrb[0].mxu0 %v1599
  %v1772 = vpop.f32.mrb[0].mxu0
  %v1773 = vadd.f32 %v1639, %v1772
  %v1774 = vpop.f32.mrb[0].mxu0
  %1775 = vmatprep.mubr.f32.mxu0 0.0
  %1776 = vmatmul.mubr.f32.gmra.mrb[0].mxu0 %v1600
  %v1777 = vpop.f32.mrb[0].mxu0
  %v1778 = vadd.f32 %v1639, %v1777
  %v1779 = vpop.f32.mrb[0].mxu0
  %1780 = vmatprep.mubr.f32.mxu0 0.0
  %1781 = vmatmul.mubr.f32.gmra.mrb[0].mxu0 %v1601
  %v1782 = vpop.f32.mrb[0].mxu0
  %v1783 = vadd.f32 %v1639, %v1782
  %v1784 = vpop.f32.mrb[0].mxu0
  %1785 = vdwg.mxu0
  %v1786 = vmax.f32 %v1708, 0.0
  %v1787 = vmax.f32 %v1713, 0.0
  %v1788 = vmax.f32 %v1718, 0.0
  %v1789 = vmax.f32 %v1723, 0.0
  %v1790 = vmax.f32 %v1728, 0.0
  %v1791 = vmax.f32 %v1733, 0.0
  %v1792 = vmax.f32 %v1738, 0.0
  %v1793 = vmax.f32 %v1743, 0.0
  %v1794 = vmax.f32 %v1748, 0.0
  %v1795 = vmax.f32 %v1753, 0.0
  %v1796 = vmax.f32 %v1758, 0.0
  %v1797 = vmax.f32 %v1763, 0.0
  %v1798 = vmax.f32 %v1768, 0.0
  %v1799 = vmax.f32 %v1773, 0.0
  %v1800 = vmax.f32 %v1778, 0.0
  %v1801 = vmax.f32 %v1783, 0.0
  %v1802 = vld [vmem:[%s8] sm:$0xff]
  %v1803 = vld [vmem:[%s8 + $0x8] sm:$0xff]
  %v1804 = vld [vmem:[%s8 + $0x10] sm:$0xff]
  %v1805 = vld [vmem:[%s8 + $0x18] sm:$0xff]
  %v1806 = vld [vmem:[%s8 + $0x20] sm:$0xff]
  %v1807 = vld [vmem:[%s8 + $0x28] sm:$0xff]
  %v1808 = vld [vmem:[%s8 + $0x30] sm:$0xff]
  %v1809 = vld [vmem:[%s8 + $0x38] sm:$0xff]
  %v1810 = vld [vmem:[%s8 + $0x40] sm:$0xff]
  %v1811 = vld [vmem:[%s8 + $0x48] sm:$0xff]
  %v1812 = vld [vmem:[%s8 + $0x50] sm:$0xff]
  %v1813 = vld [vmem:[%s8 + $0x58] sm:$0xff]
  %v1814 = vld [vmem:[%s8 + $0x60] sm:$0xff]
  %v1815 = vld [vmem:[%s8 + $0x68] sm:$0xff]
  %v1816 = vld [vmem:[%s8 + $0x70] sm:$0xff]
  %v1817 = vld [vmem:[%s8 + $0x78] sm:$0xff]
  %v1818 = vld [vmem:[%s9] sm:$0x1]
  %v1820 = vlaneseq
  %v1821 = vshrl.u32 %v1820, 7
  %v1822 = vsub.s32 0, %v1821
  %v1823 = vrot.slane %v1818, %v1822
  %1825 = vmatprep.subr.mxu0 0.0
  %1826 = vmatpush1.msra.mxu0 %v1802
  %1827 = vmatprep.subr.mxu0 0.0
  %1828 = vmatpush1.msra.mxu0 %v1803
  %1829 = vmatprep.subr.mxu0 0.0
  %1830 = vmatpush1.msra.mxu0 %v1804
  %1831 = vmatprep.subr.mxu0 0.0
  %1832 = vmatpush1.msra.mxu0 %v1805
  %1833 = vmatprep.subr.mxu0 0.0
  %1834 = vmatpush1.msra.mxu0 %v1806
  %1835 = vmatprep.subr.mxu0 0.0
  %1836 = vmatpush1.msra.mxu0 %v1807
  %1837 = vmatprep.subr.mxu0 0.0
  %1838 = vmatpush1.msra.mxu0 %v1808
  %1839 = vmatprep.subr.mxu0 0.0
  %1840 = vmatpush1.msra.mxu0 %v1809
  %1841 = vmatprep.subr.mxu0 0.0
  %1842 = vmatpush1.msra.mxu0 %v1810
  %1843 = vmatprep.subr.mxu0 0.0
  %1844 = vmatpush1.msra.mxu0 %v1811
  %1845 = vmatprep.subr.mxu0 0.0
  %1846 = vmatpush1.msra.mxu0 %v1812
  %1847 = vmatprep.subr.mxu0 0.0
  %1848 = vmatpush1.msra.mxu0 %v1813
  %1849 = vmatprep.subr.mxu0 0.0
  %1850 = vmatpush1.msra.mxu0 %v1814
  %1851 = vmatprep.subr.mxu0 0.0
  %1852 = vmatpush1.msra.mxu0 %v1815
  %1853 = vmatprep.subr.mxu0 0.0
  %1854 = vmatpush1.msra.mxu0 %v1816
  %1855 = vmatprep.subr.mxu0 0.0
  %1856 = vmatpush1.msra.mxu0 %v1817
  %1857 = vmatprep.subr.mxu0 0.0
  %1858 = vmatpush1.msra.mxu0 0.0
  %1859 = vmatprep.subr.mxu0 0.0
  %1860 = vmatpush1.msra.mxu0 0.0
  %1861 = vmatprep.subr.mxu0 0.0
  %1862 = vmatpush1.msra.mxu0 0.0
  %1863 = vmatprep.subr.mxu0 0.0
  %1864 = vmatpush1.msra.mxu0 0.0
  %1865 = vmatprep.subr.mxu0 0.0
  %1866 = vmatpush1.msra.mxu0 0.0
  %1867 = vmatprep.subr.mxu0 0.0
  %1868 = vmatpush1.msra.mxu0 0.0
  %1869 = vmatprep.subr.mxu0 0.0
  %1870 = vmatpush1.msra.mxu0 0.0
  %1871 = vmatprep.subr.mxu0 0.0
  %1872 = vmatpush1.msra.mxu0 0.0
  %1873 = vmatprep.subr.mxu0 0.0
  %1874 = vmatpush1.msra.mxu0 0.0
  %1875 = vmatprep.subr.mxu0 0.0
  %1876 = vmatpush1.msra.mxu0 0.0
  %1877 = vmatprep.subr.mxu0 0.0
  %1878 = vmatpush1.msra.mxu0 0.0
  %1879 = vmatprep.subr.mxu0 0.0
  %1880 = vmatpush1.msra.mxu0 0.0
  %1881 = vmatprep.subr.mxu0 0.0
  %1882 = vmatpush1.msra.mxu0 0.0
  %1883 = vmatprep.subr.mxu0 0.0
  %1884 = vmatpush1.msra.mxu0 0.0
  %1885 = vmatprep.subr.mxu0 0.0
  %1886 = vmatpush1.msra.mxu0 0.0
  %1887 = vmatprep.subr.mxu0 0.0
  %1888 = vmatpush1.msra.mxu0 0.0
  %1889 = vmatprep.mubr.f32.mxu0 0.0
  %1890 = vmatmul.mubr.f32.gmra.mrb[0].mxu0 %v1602
  %v1891 = vpop.f32.mrb[0].mxu0
  %v1892 = vadd.f32 %v1823, %v1891
  %v1893 = vpop.f32.mrb[0].mxu0
  %1894 = vmatprep.mubr.f32.mxu0 0.0
  %1895 = vmatmul.mubr.f32.gmra.mrb[0].mxu0 %v1603
  %v1896 = vpop.f32.mrb[0].mxu0
  %v1897 = vadd.f32 %v1823, %v1896
  %v1898 = vpop.f32.mrb[0].mxu0
  %1899 = vmatprep.mubr.f32.mxu0 0.0
  %1900 = vmatmul.mubr.f32.gmra.mrb[0].mxu0 %v1604
  %v1901 = vpop.f32.mrb[0].mxu0
  %v1902 = vadd.f32 %v1823, %v1901
  %v1903 = vpop.f32.mrb[0].mxu0
  %1904 = vmatprep.mubr.f32.mxu0 0.0
  %1905 = vmatmul.mubr.f32.gmra.mrb[0].mxu0 %v1605
  %v1906 = vpop.f32.mrb[0].mxu0
  %v1907 = vadd.f32 %v1823, %v1906
  %v1908 = vpop.f32.mrb[0].mxu0
  %1909 = vmatprep.mubr.f32.mxu0 0.0
  %1910 = vmatmul.mubr.f32.gmra.mrb[0].mxu0 %v1606
  %v1911 = vpop.f32.mrb[0].mxu0
  %v1912 = vadd.f32 %v1823, %v1911
  %v1913 = vpop.f32.mrb[0].mxu0
  %1914 = vmatprep.mubr.f32.mxu0 0.0
  %1915 = vmatmul.mubr.f32.gmra.mrb[0].mxu0 %v1607
  %v1916 = vpop.f32.mrb[0].mxu0
  %v1917 = vadd.f32 %v1823, %v1916
  %v1918 = vpop.f32.mrb[0].mxu0
  %1919 = vmatprep.mubr.f32.mxu0 0.0
  %1920 = vmatmul.mubr.f32.gmra.mrb[0].mxu0 %v1608
  %v1921 = vpop.f32.mrb[0].mxu0
  %v1922 = vadd.f32 %v1823, %v1921
  %v1923 = vpop.f32.mrb[0].mxu0
  %1924 = vmatprep.mubr.f32.mxu0 0.0
  %1925 = vmatmul.mubr.f32.gmra.mrb[0].mxu0 %v1609
  %v1926 = vpop.f32.mrb[0].mxu0
  %v1927 = vadd.f32 %v1823, %v1926
  %v1928 = vpop.f32.mrb[0].mxu0
  %1929 = vmatprep.mubr.f32.mxu0 0.0
  %1930 = vmatmul.mubr.f32.gmra.mrb[0].mxu0 %v1610
  %v1931 = vpop.f32.mrb[0].mxu0
  %v1932 = vadd.f32 %v1823, %v1931
  %v1933 = vpop.f32.mrb[0].mxu0
  %1934 = vmatprep.mubr.f32.mxu0 0.0
  %1935 = vmatmul.mubr.f32.gmra.mrb[0].mxu0 %v1611
  %v1936 = vpop.f32.mrb[0].mxu0
  %v1937 = vadd.f32 %v1823, %v1936
  %v1938 = vpop.f32.mrb[0].mxu0
  %1939 = vmatprep.mubr.f32.mxu0 0.0
  %1940 = vmatmul.mubr.f32.gmra.mrb[0].mxu0 %v1612
  %v1941 = vpop.f32.mrb[0].mxu0
  %v1942 = vadd.f32 %v1823, %v1941
  %v1943 = vpop.f32.mrb[0].mxu0
  %1944 = vmatprep.mubr.f32.mxu0 0.0
  %1945 = vmatmul.mubr.f32.gmra.mrb[0].mxu0 %v1613
  %v1946 = vpop.f32.mrb[0].mxu0
  %v1947 = vadd.f32 %v1823, %v1946
  %v1948 = vpop.f32.mrb[0].mxu0
  %1949 = vmatprep.mubr.f32.mxu0 0.0
  %1950 = vmatmul.mubr.f32.gmra.mrb[0].mxu0 %v1614
  %v1951 = vpop.f32.mrb[0].mxu0
  %v1952 = vadd.f32 %v1823, %v1951
  %v1953 = vpop.f32.mrb[0].mxu0
  %1954 = vmatprep.mubr.f32.mxu0 0.0
  %1955 = vmatmul.mubr.f32.gmra.mrb[0].mxu0 %v1615
  %v1956 = vpop.f32.mrb[0].mxu0
  %v1957 = vadd.f32 %v1823, %v1956
  %v1958 = vpop.f32.mrb[0].mxu0
  %1959 = vmatprep.mubr.f32.mxu0 0.0
  %1960 = vmatmul.mubr.f32.gmra.mrb[0].mxu0 %v1616
  %v1961 = vpop.f32.mrb[0].mxu0
  %v1962 = vadd.f32 %v1823, %v1961
  %v1963 = vpop.f32.mrb[0].mxu0
  %1964 = vmatprep.mubr.f32.mxu0 0.0
  %1965 = vmatmul.mubr.f32.gmra.mrb[0].mxu0 %v1617
  %v1966 = vpop.f32.mrb[0].mxu0
  %v1967 = vadd.f32 %v1823, %v1966
  %v1968 = vpop.f32.mrb[0].mxu0
  %1969 = vdwg.mxu0
  %v1970 = vmax.f32 %v1892, 0.0
  %v1971 = vmax.f32 %v1897, 0.0
  %v1972 = vmax.f32 %v1902, 0.0
  %v1973 = vmax.f32 %v1907, 0.0
  %v1974 = vmax.f32 %v1912, 0.0
  %v1975 = vmax.f32 %v1917, 0.0
  %v1976 = vmax.f32 %v1922, 0.0
  %v1977 = vmax.f32 %v1927, 0.0
  %v1978 = vmax.f32 %v1932, 0.0
  %v1979 = vmax.f32 %v1937, 0.0
  %v1980 = vmax.f32 %v1942, 0.0
  %v1981 = vmax.f32 %v1947, 0.0
  %v1982 = vmax.f32 %v1952, 0.0
  %v1983 = vmax.f32 %v1957, 0.0
  %v1984 = vmax.f32 %v1962, 0.0
  %v1985 = vmax.f32 %v1967, 0.0
  %v1986 = vrot.slane %v1786, 4
  %v1987 = vmax.f32 %v1786, %v1986
  %v1988 = vrot.slane %v1987, 2
  %v1989 = vmax.f32 %v1987, %v1988
  %v1990 = vrot.slane %v1989, 1
  %v1991 = vmax.f32 %v1989, %v1990
  %v1992 = vrot.slane %v1787, 4
  %v1993 = vmax.f32 %v1787, %v1992
  %v1994 = vrot.slane %v1993, 2
  %v1995 = vmax.f32 %v1993, %v1994
  %v1996 = vrot.slane %v1995, 1
  %v1997 = vmax.f32 %v1995, %v1996
  %v1998 = vrot.slane %v1788, 4
  %v1999 = vmax.f32 %v1788, %v1998
  %v2000 = vrot.slane %v1999, 2
  %v2001 = vmax.f32 %v1999, %v2000
  %v2002 = vrot.slane %v2001, 1
  %v2003 = vmax.f32 %v2001, %v2002
  %v2004 = vrot.slane %v1789, 4
  %v2005 = vmax.f32 %v1789, %v2004
  %v2006 = vrot.slane %v2005, 2
  %v2007 = vmax.f32 %v2005, %v2006
  %v2008 = vrot.slane %v2007, 1
  %v2009 = vmax.f32 %v2007, %v2008
  %v2010 = vrot.slane %v1790, 4
  %v2011 = vmax.f32 %v1790, %v2010
  %v2012 = vrot.slane %v2011, 2
  %v2013 = vmax.f32 %v2011, %v2012
  %v2014 = vrot.slane %v2013, 1
  %v2015 = vmax.f32 %v2013, %v2014
  %v2016 = vrot.slane %v1791, 4
  %v2017 = vmax.f32 %v1791, %v2016
  %v2018 = vrot.slane %v2017, 2
  %v2019 = vmax.f32 %v2017, %v2018
  %v2020 = vrot.slane %v2019, 1
  %v2021 = vmax.f32 %v2019, %v2020
  %v2022 = vrot.slane %v1792, 4
  %v2023 = vmax.f32 %v1792, %v2022
  %v2024 = vrot.slane %v2023, 2
  %v2025 = vmax.f32 %v2023, %v2024
  %v2026 = vrot.slane %v2025, 1
  %v2027 = vmax.f32 %v2025, %v2026
  %v2028 = vrot.slane %v1793, 4
  %v2029 = vmax.f32 %v1793, %v2028
  %v2030 = vrot.slane %v2029, 2
  %v2031 = vmax.f32 %v2029, %v2030
  %v2032 = vrot.slane %v2031, 1
  %v2033 = vmax.f32 %v2031, %v2032
  %v2034 = vrot.slane %v1794, 4
  %v2035 = vmax.f32 %v1794, %v2034
  %v2036 = vrot.slane %v2035, 2
  %v2037 = vmax.f32 %v2035, %v2036
  %v2038 = vrot.slane %v2037, 1
  %v2039 = vmax.f32 %v2037, %v2038
  %v2040 = vrot.slane %v1795, 4
  %v2041 = vmax.f32 %v1795, %v2040
  %v2042 = vrot.slane %v2041, 2
  %v2043 = vmax.f32 %v2041, %v2042
  %v2044 = vrot.slane %v2043, 1
  %v2045 = vmax.f32 %v2043, %v2044
  %v2046 = vrot.slane %v1796, 4
  %v2047 = vmax.f32 %v1796, %v2046
  %v2048 = vrot.slane %v2047, 2
  %v2049 = vmax.f32 %v2047, %v2048
  %v2050 = vrot.slane %v2049, 1
  %v2051 = vmax.f32 %v2049, %v2050
  %v2052 = vrot.slane %v1797, 4
  %v2053 = vmax.f32 %v1797, %v2052
  %v2054 = vrot.slane %v2053, 2
  %v2055 = vmax.f32 %v2053, %v2054
  %v2056 = vrot.slane %v2055, 1
  %v2057 = vmax.f32 %v2055, %v2056
  %v2058 = vrot.slane %v1798, 4
  %v2059 = vmax.f32 %v1798, %v2058
  %v2060 = vrot.slane %v2059, 2
  %v2061 = vmax.f32 %v2059, %v2060
  %v2062 = vrot.slane %v2061, 1
  %v2063 = vmax.f32 %v2061, %v2062
  %v2064 = vrot.slane %v1799, 4
  %v2065 = vmax.f32 %v1799, %v2064
  %v2066 = vrot.slane %v2065, 2
  %v2067 = vmax.f32 %v2065, %v2066
  %v2068 = vrot.slane %v2067, 1
  %v2069 = vmax.f32 %v2067, %v2068
  %v2070 = vrot.slane %v1800, 4
  %v2071 = vmax.f32 %v1800, %v2070
  %v2072 = vrot.slane %v2071, 2
  %v2073 = vmax.f32 %v2071, %v2072
  %v2074 = vrot.slane %v2073, 1
  %v2075 = vmax.f32 %v2073, %v2074
  %v2076 = vrot.slane %v1801, 4
  %v2077 = vmax.f32 %v1801, %v2076
  %v2078 = vrot.slane %v2077, 2
  %v2079 = vmax.f32 %v2077, %v2078
  %v2080 = vrot.slane %v2079, 1
  %v2081 = vmax.f32 %v2079, %v2080
  %v2082 = vrot.slane %v1970, 4
  %v2083 = vmax.f32 %v1970, %v2082
  %v2084 = vrot.slane %v2083, 2
  %v2085 = vmax.f32 %v2083, %v2084
  %v2086 = vrot.slane %v2085, 1
  %v2087 = vmax.f32 %v2085, %v2086
  %v2088 = vrot.slane %v1971, 4
  %v2089 = vmax.f32 %v1971, %v2088
  %v2090 = vrot.slane %v2089, 2
  %v2091 = vmax.f32 %v2089, %v2090
  %v2092 = vrot.slane %v2091, 1
  %v2093 = vmax.f32 %v2091, %v2092
  %v2094 = vrot.slane %v1972, 4
  %v2095 = vmax.f32 %v1972, %v2094
  %v2096 = vrot.slane %v2095, 2
  %v2097 = vmax.f32 %v2095, %v2096
  %v2098 = vrot.slane %v2097, 1
  %v2099 = vmax.f32 %v2097, %v2098
  %v2100 = vrot.slane %v1973, 4
  %v2101 = vmax.f32 %v1973, %v2100
  %v2102 = vrot.slane %v2101, 2
  %v2103 = vmax.f32 %v2101, %v2102
  %v2104 = vrot.slane %v2103, 1
  %v2105 = vmax.f32 %v2103, %v2104
  %v2106 = vrot.slane %v1974, 4
  %v2107 = vmax.f32 %v1974, %v2106
  %v2108 = vrot.slane %v2107, 2
  %v2109 = vmax.f32 %v2107, %v2108
  %v2110 = vrot.slane %v2109, 1
  %v2111 = vmax.f32 %v2109, %v2110
  %v2112 = vrot.slane %v1975, 4
  %v2113 = vmax.f32 %v1975, %v2112
  %v2114 = vrot.slane %v2113, 2
  %v2115 = vmax.f32 %v2113, %v2114
  %v2116 = vrot.slane %v2115, 1
  %v2117 = vmax.f32 %v2115, %v2116
  %v2118 = vrot.slane %v1976, 4
  %v2119 = vmax.f32 %v1976, %v2118
  %v2120 = vrot.slane %v2119, 2
  %v2121 = vmax.f32 %v2119, %v2120
  %v2122 = vrot.slane %v2121, 1
  %v2123 = vmax.f32 %v2121, %v2122
  %v2124 = vrot.slane %v1977, 4
  %v2125 = vmax.f32 %v1977, %v2124
  %v2126 = vrot.slane %v2125, 2
  %v2127 = vmax.f32 %v2125, %v2126
  %v2128 = vrot.slane %v2127, 1
  %v2129 = vmax.f32 %v2127, %v2128
  %v2130 = vrot.slane %v1978, 4
  %v2131 = vmax.f32 %v1978, %v2130
  %v2132 = vrot.slane %v2131, 2
  %v2133 = vmax.f32 %v2131, %v2132
  %v2134 = vrot.slane %v2133, 1
  %v2135 = vmax.f32 %v2133, %v2134
  %v2136 = vrot.slane %v1979, 4
  %v2137 = vmax.f32 %v1979, %v2136
  %v2138 = vrot.slane %v2137, 2
  %v2139 = vmax.f32 %v2137, %v2138
  %v2140 = vrot.slane %v2139, 1
  %v2141 = vmax.f32 %v2139, %v2140
  %v2142 = vrot.slane %v1980, 4
  %v2143 = vmax.f32 %v1980, %v2142
  %v2144 = vrot.slane %v2143, 2
  %v2145 = vmax.f32 %v2143, %v2144
  %v2146 = vrot.slane %v2145, 1
  %v2147 = vmax.f32 %v2145, %v2146
  %v2148 = vrot.slane %v1981, 4
  %v2149 = vmax.f32 %v1981, %v2148
  %v2150 = vrot.slane %v2149, 2
  %v2151 = vmax.f32 %v2149, %v2150
  %v2152 = vrot.slane %v2151, 1
  %v2153 = vmax.f32 %v2151, %v2152
  %v2154 = vrot.slane %v1982, 4
  %v2155 = vmax.f32 %v1982, %v2154
  %v2156 = vrot.slane %v2155, 2
  %v2157 = vmax.f32 %v2155, %v2156
  %v2158 = vrot.slane %v2157, 1
  %v2159 = vmax.f32 %v2157, %v2158
  %v2160 = vrot.slane %v1983, 4
  %v2161 = vmax.f32 %v1983, %v2160
  %v2162 = vrot.slane %v2161, 2
  %v2163 = vmax.f32 %v2161, %v2162
  %v2164 = vrot.slane %v2163, 1
  %v2165 = vmax.f32 %v2163, %v2164
  %v2166 = vrot.slane %v1984, 4
  %v2167 = vmax.f32 %v1984, %v2166
  %v2168 = vrot.slane %v2167, 2
  %v2169 = vmax.f32 %v2167, %v2168
  %v2170 = vrot.slane %v2169, 1
  %v2171 = vmax.f32 %v2169, %v2170
  %v2172 = vrot.slane %v1985, 4
  %v2173 = vmax.f32 %v1985, %v2172
  %v2174 = vrot.slane %v2173, 2
  %v2175 = vmax.f32 %v2173, %v2174
  %v2176 = vrot.slane %v2175, 1
  %v2177 = vmax.f32 %v2175, %v2176
  %v2178 = vadd.f32 %v1991, %v2087
  %v2179 = vadd.f32 %v1997, %v2093
  %v2180 = vadd.f32 %v2003, %v2099
  %v2181 = vadd.f32 %v2009, %v2105
  %v2182 = vadd.f32 %v2015, %v2111
  %v2183 = vadd.f32 %v2021, %v2117
  %v2184 = vadd.f32 %v2027, %v2123
  %v2185 = vadd.f32 %v2033, %v2129
  %v2186 = vadd.f32 %v2039, %v2135
  %v2187 = vadd.f32 %v2045, %v2141
  %v2188 = vadd.f32 %v2051, %v2147
  %v2189 = vadd.f32 %v2057, %v2153
  %v2190 = vadd.f32 %v2063, %v2159
  %v2191 = vadd.f32 %v2069, %v2165
  %v2192 = vadd.f32 %v2075, %v2171
  %v2193 = vadd.f32 %v2081, %v2177
  %v2210 = vsel %vm1027, %v2179, %v2178
  %v2211 = vsel %vm1029, %v2180, %v2210
  %v2212 = vsel %vm1031, %v2181, %v2211
  %v2213 = vsel %vm1033, %v2182, %v2212
  %v2214 = vsel %vm1035, %v2183, %v2213
  %v2215 = vsel %vm1037, %v2184, %v2214
  %v2216 = vsel %vm1039, %v2185, %v2215
  %v2217 = vsel %vm1027, %v2187, %v2186
  %v2218 = vsel %vm1029, %v2188, %v2217
  %v2219 = vsel %vm1031, %v2189, %v2218
  %v2220 = vsel %vm1033, %v2190, %v2219
  %v2221 = vsel %vm1035, %v2191, %v2220
  %v2222 = vsel %vm1037, %v2192, %v2221
  %v2223 = vsel %vm1039, %v2193, %v2222
  %2226 = vst [vmem:[%s10] sm:$0xff] %v2216
  %2227 = vst [vmem:[%s10 + $0x8] sm:$0xff] %v2223
  // Predicated region
  $region42: #{p3embed_forward.1} parent=0 // pred_check
    _
  $region43: #{p3embed_forward.1} parent=0 // pred_check_branch
    %2229 = sbr.rel (0) target = $region45
  $region44: #{p3embed_forward.1} parent=0 // pred_region
    _
  $region45: #{p3embed_forward.1} parent=0 // pred_fallthru
    _
  // Predicated region
  $region46: #{p3embed_forward.1} parent=0 // pred_check
    _
  $region47: #{p3embed_forward.1} parent=0 // pred_check_branch
    %2231 = sbr.rel (0) target = $region49
  $region48: #{p3embed_forward.1} parent=0 // pred_region
    _
  $region49: #{p3embed_forward.1} parent=0 // pred_fallthru
    _

</llo_original>
